<compile_context>
chip_gen: v7x
topology: tpu7x:2x2x1
jax: 0.10.0
libtpu: 0.0.40
codegen_flags: <defaults>
</compile_context>

<pallas_src>
import math

import jax
import jax.numpy as jnp
from jax import lax
from jax.experimental import pallas as pl


# -----------------------------------------------------------------------------
# Fused kernel: [LN -> MHSA -> +res] -> [LN -> MLP(GELU) -> +res]
# -----------------------------------------------------------------------------
def _mid_feature_kernel(x_ref, p_ref, wqkv_ref, wo_ref, w1_ref, w2_ref, o_ref):
    """Refs:
      x_ref    : (B, N, C)  f32 activations
      p_ref    : (16, 128)  f32 packed 1-row params
                 rows: 0 g1, 1 be1, 2 bq, 3 bk, 4 bv, 5 bproj, 6 g2, 7 be2,
                       8 b1 (width Hm), 9 b2
      wqkv_ref : (3*H, C, D) bf16 per-head Wq/Wk/Wv  (index = kind*H + h)
      wo_ref   : (H, D, C)   bf16 per-head row-block of Wproj
      w1_ref   : (C, Hm)     bf16 MLP fc1
      w2_ref   : (Hm, C)     bf16 MLP fc2
      o_ref    : (B, N, C)
    """
    eps = 1e-5
    B, N, C = x_ref.shape
    H, D, _ = wo_ref.shape
    Hm = w1_ref.shape[1]
    M = B * N

    # (B, N, C) -> (M, C): leading-dim merge, layout preserving.
    x = x_ref[...].astype(jnp.float32).reshape(M, C)

    def layernorm(v, g, b):
        mu = jnp.mean(v, axis=-1, keepdims=True)
        var = jnp.mean(jnp.square(v - mu), axis=-1, keepdims=True)
        return (v - mu) * lax.rsqrt(var + eps) * g + b

    def erf(z):
        # Abramowitz & Stegun 7.1.26 (|err| < 1.5e-7): exact-erf GELU semantics
        # without relying on an erf lowering in Mosaic (only exp/abs/where).
        a1, a2, a3 = 0.254829592, -0.284496736, 1.421413741
        a4, a5, pp = -1.453152027, 1.061405429, 0.3275911
        t = 1.0 / (1.0 + pp * jnp.abs(z))
        poly = ((((a5 * t + a4) * t + a3) * t + a2) * t + a1) * t
        e = 1.0 - poly * jnp.exp(-(z * z))
        return jnp.where(z < 0.0, -e, e)

    # ---------------- norm1 + Tem_attn (MHSA) ----------------
    g1, be1 = p_ref[0:1, 0:C], p_ref[1:2, 0:C]
    xn = layernorm(x, g1, be1)
    xn_b = xn.astype(jnp.bfloat16)                      # MXU operands in bf16

    scale = float(D) ** -0.5
    attn = jnp.zeros((M, C), jnp.float32)
    for h in range(H):                                  # static unroll, H small
        bq = p_ref[2:3, h * D:(h + 1) * D]              # (1, D) f32
        bk = p_ref[3:4, h * D:(h + 1) * D]
        bv = p_ref[4:5, h * D:(h + 1) * D]
        # Full-width (M, C) x (C, D) dots -- no sub-lane slicing of activations.
        qh = jnp.dot(xn_b, wqkv_ref[0 * H + h], preferred_element_type=jnp.float32) + bq
        kh = jnp.dot(xn_b, wqkv_ref[1 * H + h], preferred_element_type=jnp.float32) + bk
        vh = jnp.dot(xn_b, wqkv_ref[2 * H + h], preferred_element_type=jnp.float32) + bv
        qh = (qh * scale).reshape(B, N, D)              # leading split, layout preserving
        kh = kh.reshape(B, N, D)
        vh = vh.reshape(B, N, D)
        # Batched over B, contraction directly over D (no k transpose).
        s = jnp.einsum("bnd,bmd->bnm",
                       qh.astype(jnp.bfloat16), kh.astype(jnp.bfloat16),
                       preferred_element_type=jnp.float32)          # (B, N, N)
        s = s - jnp.max(s, axis=-1, keepdims=True)
        pr = jnp.exp(s)
        pr = pr / jnp.sum(pr, axis=-1, keepdims=True)   # exact softmax divide
        oh = jnp.einsum("bnm,bmd->bnd",
                        pr.astype(jnp.bfloat16), vh.astype(jnp.bfloat16),
                        preferred_element_type=jnp.float32)          # (B, N, D)
        # Accumulate head h's row-block of the output projection (no lane concat).
        attn = attn + jnp.dot(oh.reshape(M, D).astype(jnp.bfloat16), wo_ref[h],
                              preferred_element_type=jnp.float32)
    attn = attn + p_ref[5:6, 0:C]                       # proj bias
    x = x + attn                                        # ls1 / dropout == Identity

    # ---------------- norm2 + Mlp ----------------
    g2, be2 = p_ref[6:7, 0:C], p_ref[7:8, 0:C]
    xn2 = layernorm(x, g2, be2)
    h1 = jnp.dot(xn2.astype(jnp.bfloat16), w1_ref[...],
                 preferred_element_type=jnp.float32) + p_ref[8:9, 0:Hm]
    h1 = 0.5 * h1 * (1.0 + erf(h1 * (1.0 / math.sqrt(2.0))))        # exact-erf GELU
    y = jnp.dot(h1.astype(jnp.bfloat16), w2_ref[...],
                preferred_element_type=jnp.float32) + p_ref[9:10, 0:C]

    x = x + y                                           # ls2 == Identity
    o_ref[...] = x.reshape(B, N, C).astype(o_ref.dtype)


# -----------------------------------------------------------------------------
# Wrapper: repack PyTorch-layout params into the kernel's TPU-friendly layout.
# All repacking is plain XLA outside the kernel (free relative to the kernel).
# -----------------------------------------------------------------------------
def pack_mid_feature_params(params, *, num_heads):
    C = params["wq"].shape[0]
    H = num_heads
    D = C // H
    Hm = params["w1"].shape[1]
    lanes = max(128, C, Hm)

    # One lane-padded f32 slab holding every 1-row parameter (single DMA).
    rows = [("g1", C), ("be1", C), ("bq", C), ("bk", C), ("bv", C),
            ("bproj", C), ("g2", C), ("be2", C), ("b1", Hm), ("b2", C)]
    nrows = ((len(rows) + 7) // 8) * 8
    slab = jnp.zeros((nrows, lanes), jnp.float32)
    for i, (name, w) in enumerate(rows):
        slab = slab.at[i, :w].set(params[name].reshape(-1).astype(jnp.float32))

    def per_head_cols(w):                               # (C, C) -> (H, C, D)
        return w.reshape(C, H, D).transpose(1, 0, 2)

    wqkv_heads = jnp.concatenate(
        [per_head_cols(params["wq"]),
         per_head_cols(params["wk"]),
         per_head_cols(params["wv"])], axis=0).astype(jnp.bfloat16)   # (3H, C, D)
    wo_heads = params["wproj"].reshape(H, D, C).astype(jnp.bfloat16)  # (H, D, C)
    w1 = params["w1"].astype(jnp.bfloat16)
    w2 = params["w2"].astype(jnp.bfloat16)
    return slab, wqkv_heads, wo_heads, w1, w2


def mid_feature_forward(x, params, *, num_heads):
    B, N, C = x.shape
    assert C % num_heads == 0
    slab, wqkv_heads, wo_heads, w1, w2 = pack_mid_feature_params(
        params, num_heads=num_heads)
    # Whole problem in a single invocation: everything fits in a handful of
    # VMEM tiles, so one step avoids per-grid-step pipeline overhead and any
    # double-buffering of grid-invariant weights (best on 1-TC v5e/v6e; also
    # the right call on v7x at this size -- see review).
    return pl.pallas_call(
        _mid_feature_kernel,
        out_shape=jax.ShapeDtypeStruct((B, N, C), x.dtype),
    )(x, slab, wqkv_heads, wo_heads, w1, w2)


# -----------------------------------------------------------------------------
# Pure-JAX reference (PyTorch semantics) for correctness check
# -----------------------------------------------------------------------------
def mid_feature_ref(x, p, *, num_heads):
    B, N, C = x.shape
    D = C // num_heads
    eps = 1e-5

    def ln(v, g, b):
        mu = jnp.mean(v, axis=-1, keepdims=True)
        var = jnp.mean((v - mu) ** 2, axis=-1, keepdims=True)
        return (v - mu) / jnp.sqrt(var + eps) * g + b

    xn = ln(x, p["g1"], p["be1"])
    q = xn @ p["wq"] + p["bq"]
    k = xn @ p["wk"] + p["bk"]
    v = xn @ p["wv"] + p["bv"]

    def heads(t):
        return t.reshape(B, N, num_heads, D).transpose(0, 2, 1, 3)

    q, k, v = heads(q), heads(k), heads(v)
    s = jnp.einsum("bhnd,bhmd->bhnm", q, k) * (D ** -0.5)
    a = jax.nn.softmax(s, axis=-1)
    o = jnp.einsum("bhnm,bhmd->bhnd", a, v).transpose(0, 2, 1, 3).reshape(B, N, C)
    o = o @ p["wproj"] + p["bproj"]
    x = x + o

    xn2 = ln(x, p["g2"], p["be2"])
    h1 = xn2 @ p["w1"] + p["b1"]
    h1 = 0.5 * h1 * (1.0 + lax.erf(h1 / jnp.sqrt(2.0)))
    y = h1 @ p["w2"] + p["b2"]
    return x + y


# -----------------------------------------------------------------------------
# Main
# -----------------------------------------------------------------------------
if __name__ == "__main__":
    B, N, C = 2, 8, 32            # batch, temporal tokens (seq), dim
    num_heads = 4
    mlp_ratio = 4.0
    Hm = int(C * mlp_ratio)       # 128

    key = jax.random.PRNGKey(0)
    ks = jax.random.split(key, 13)

    def init_w(k, shape, scale=0.05):
        return jax.random.normal(k, shape, jnp.float32) * scale

    params = {
        "g1":    jnp.ones((C,), jnp.float32),
        "be1":   jnp.zeros((C,), jnp.float32),
        "wq":    init_w(ks[0], (C, C)),
        "wk":    init_w(ks[1], (C, C)),
        "wv":    init_w(ks[2], (C, C)),
        "bq":    init_w(ks[3], (C,)),
        "bk":    init_w(ks[4], (C,)),
        "bv":    init_w(ks[5], (C,)),
        "wproj": init_w(ks[6], (C, C)),
        "bproj": init_w(ks[7], (C,)),
        "g2":    jnp.ones((C,), jnp.float32),
        "be2":   jnp.zeros((C,), jnp.float32),
        "w1":    init_w(ks[8], (C, Hm)),
        "b1":    init_w(ks[9], (Hm,)),
        "w2":    init_w(ks[10], (Hm, C)),
        "b2":    init_w(ks[11], (C,)),
    }

    x = jax.random.normal(ks[12], (B, N, C), jnp.float32)

    ref = mid_feature_ref(x, params, num_heads=num_heads)
    out = jax.block_until_ready(mid_feature_forward(x, params, num_heads=num_heads))

    assert out.shape == (B, N, C)
    # Tolerance covers the bf16 matmul operands (f32 accumulation) on the MXU.
    assert jnp.allclose(out, ref, atol=2e-2, rtol=2e-2), "mismatch vs reference"

    print("KERNEL_OK")
</pallas_src>

<mosaic_0001>
module attributes {stable_mosaic.version = 11 : i64} {
  func.func @_mid_feature_kernel(%arg0: memref<2x8x32xf32, #tpu.memory_space<vmem>>, %arg1: memref<16x128xf32, #tpu.memory_space<vmem>>, %arg2: memref<12x32x8xbf16, #tpu.memory_space<vmem>>, %arg3: memref<4x8x32xbf16, #tpu.memory_space<vmem>>, %arg4: memref<32x128xbf16, #tpu.memory_space<vmem>>, %arg5: memref<128x32xbf16, #tpu.memory_space<vmem>>, %arg6: memref<2x8x32xf32, #tpu.memory_space<vmem>>) attributes {dimension_semantics = [], scalar_prefetch = 0 : i64, scratch_operands = 0 : i64, tpu.core_type = #tpu.core_type<tc>} {
    %c0 = arith.constant 0 : index
    %c0_0 = arith.constant 0 : index
    %c0_1 = arith.constant 0 : index
    %0 = vector.load %arg0[%c0, %c0_0, %c0_1] : memref<2x8x32xf32, #tpu.memory_space<vmem>>, vector<2x8x32xf32>
    %1 = vector.shape_cast %0 : vector<2x8x32xf32> to vector<16x32xf32>
    %c0_2 = arith.constant 0 : index
    %c0_3 = arith.constant 0 : index
    %2 = vector.load %arg1[%c0_2, %c0_3] : memref<16x128xf32, #tpu.memory_space<vmem>>, vector<1x32xf32>
    %c1 = arith.constant 1 : index
    %c0_4 = arith.constant 0 : index
    %3 = vector.load %arg1[%c1, %c0_4] : memref<16x128xf32, #tpu.memory_space<vmem>>, vector<1x32xf32>
    %cst = arith.constant dense<0.000000e+00> : vector<16xf32>
    %4 = vector.multi_reduction <add>, %1, %cst [1] : vector<16x32xf32> to vector<16xf32>
    %5 = vector.shape_cast %4 : vector<16xf32> to vector<16x1xf32>
    %cst_5 = arith.constant 3.200000e+01 : f32
    %6 = vector.broadcast %cst_5 : f32 to vector<16x1xf32>
    %7 = arith.divf %5, %6 : vector<16x1xf32>
    %8 = vector.broadcast %7 : vector<16x1xf32> to vector<16x32xf32>
    %9 = arith.subf %1, %8 : vector<16x32xf32>
    %10 = arith.mulf %9, %9 : vector<16x32xf32>
    %cst_6 = arith.constant dense<0.000000e+00> : vector<16xf32>
    %11 = vector.multi_reduction <add>, %10, %cst_6 [1] : vector<16x32xf32> to vector<16xf32>
    %12 = vector.shape_cast %11 : vector<16xf32> to vector<16x1xf32>
    %cst_7 = arith.constant 3.200000e+01 : f32
    %13 = vector.broadcast %cst_7 : f32 to vector<16x1xf32>
    %14 = arith.divf %12, %13 : vector<16x1xf32>
    %15 = vector.broadcast %7 : vector<16x1xf32> to vector<16x32xf32>
    %16 = arith.subf %1, %15 : vector<16x32xf32>
    %cst_8 = arith.constant 9.99999974E-6 : f32
    %17 = vector.broadcast %cst_8 : f32 to vector<16x1xf32>
    %18 = arith.addf %14, %17 : vector<16x1xf32>
    %19 = math.rsqrt %18 : vector<16x1xf32>
    %20 = vector.broadcast %19 : vector<16x1xf32> to vector<16x32xf32>
    %21 = arith.mulf %16, %20 : vector<16x32xf32>
    %22 = vector.broadcast %2 : vector<1x32xf32> to vector<16x32xf32>
    %23 = arith.mulf %21, %22 : vector<16x32xf32>
    %24 = vector.broadcast %3 : vector<1x32xf32> to vector<16x32xf32>
    %25 = arith.addf %23, %24 : vector<16x32xf32>
    %26 = arith.truncf %25 : vector<16x32xf32> to vector<16x32xbf16>
    %cst_9 = arith.constant 0.000000e+00 : f32
    %27 = vector.broadcast %cst_9 : f32 to vector<16x32xf32>
    %c2 = arith.constant 2 : index
    %c0_10 = arith.constant 0 : index
    %28 = vector.load %arg1[%c2, %c0_10] : memref<16x128xf32, #tpu.memory_space<vmem>>, vector<1x8xf32>
    %c3 = arith.constant 3 : index
    %c0_11 = arith.constant 0 : index
    %29 = vector.load %arg1[%c3, %c0_11] : memref<16x128xf32, #tpu.memory_space<vmem>>, vector<1x8xf32>
    %c4 = arith.constant 4 : index
    %c0_12 = arith.constant 0 : index
    %30 = vector.load %arg1[%c4, %c0_12] : memref<16x128xf32, #tpu.memory_space<vmem>>, vector<1x8xf32>
    %c0_13 = arith.constant 0 : index
    %c0_14 = arith.constant 0 : index
    %c0_15 = arith.constant 0 : index
    %31 = vector.load %arg2[%c0_13, %c0_14, %c0_15] : memref<12x32x8xbf16, #tpu.memory_space<vmem>>, vector<1x32x8xbf16>
    %32 = vector.shape_cast %31 : vector<1x32x8xbf16> to vector<32x8xbf16>
    %cst_16 = arith.constant dense<0.000000e+00> : vector<16x8xf32>
    %33 = tpu.matmul %26, %32, %cst_16 {dimension_numbers = #tpu.dot_dimension_numbers<[1], [0], [0], [1], [0, 0, 1, 1], [], []>} : vector<16x32xbf16>, vector<32x8xbf16>, vector<16x8xf32> -> vector<16x8xf32>
    %34 = vector.broadcast %28 : vector<1x8xf32> to vector<16x8xf32>
    %35 = arith.addf %33, %34 : vector<16x8xf32>
    %c4_17 = arith.constant 4 : index
    %c0_18 = arith.constant 0 : index
    %c0_19 = arith.constant 0 : index
    %36 = vector.load %arg2[%c4_17, %c0_18, %c0_19] : memref<12x32x8xbf16, #tpu.memory_space<vmem>>, vector<1x32x8xbf16>
    %37 = vector.shape_cast %36 : vector<1x32x8xbf16> to vector<32x8xbf16>
    %cst_20 = arith.constant dense<0.000000e+00> : vector<16x8xf32>
    %38 = tpu.matmul %26, %37, %cst_20 {dimension_numbers = #tpu.dot_dimension_numbers<[1], [0], [0], [1], [0, 0, 1, 1], [], []>} : vector<16x32xbf16>, vector<32x8xbf16>, vector<16x8xf32> -> vector<16x8xf32>
    %39 = vector.broadcast %29 : vector<1x8xf32> to vector<16x8xf32>
    %40 = arith.addf %38, %39 : vector<16x8xf32>
    %c8 = arith.constant 8 : index
    %c0_21 = arith.constant 0 : index
    %c0_22 = arith.constant 0 : index
    %41 = vector.load %arg2[%c8, %c0_21, %c0_22] : memref<12x32x8xbf16, #tpu.memory_space<vmem>>, vector<1x32x8xbf16>
    %42 = vector.shape_cast %41 : vector<1x32x8xbf16> to vector<32x8xbf16>
    %cst_23 = arith.constant dense<0.000000e+00> : vector<16x8xf32>
    %43 = tpu.matmul %26, %42, %cst_23 {dimension_numbers = #tpu.dot_dimension_numbers<[1], [0], [0], [1], [0, 0, 1, 1], [], []>} : vector<16x32xbf16>, vector<32x8xbf16>, vector<16x8xf32> -> vector<16x8xf32>
    %44 = vector.broadcast %30 : vector<1x8xf32> to vector<16x8xf32>
    %45 = arith.addf %43, %44 : vector<16x8xf32>
    %cst_24 = arith.constant 0.353553385 : f32
    %46 = vector.broadcast %cst_24 : f32 to vector<16x8xf32>
    %47 = arith.mulf %35, %46 : vector<16x8xf32>
    %48 = vector.shape_cast %47 : vector<16x8xf32> to vector<2x8x8xf32>
    %49 = vector.shape_cast %40 : vector<16x8xf32> to vector<2x8x8xf32>
    %50 = vector.shape_cast %45 : vector<16x8xf32> to vector<2x8x8xf32>
    %51 = arith.truncf %48 : vector<2x8x8xf32> to vector<2x8x8xbf16>
    %52 = arith.truncf %49 : vector<2x8x8xf32> to vector<2x8x8xbf16>
    "tpu.trace_start"() <{level = 10 : i32, message = "bnd,bmd->bnm"}> : () -> ()
    %cst_25 = arith.constant dense<0.000000e+00> : vector<2x8x8xf32>
    %53 = tpu.matmul %51, %52, %cst_25 {dimension_numbers = #tpu.dot_dimension_numbers<[2], [2], [1], [1], [0, 0, 0, 1, 1, 1], [0], [0]>} : vector<2x8x8xbf16>, vector<2x8x8xbf16>, vector<2x8x8xf32> -> vector<2x8x8xf32>
    "tpu.trace_stop"() : () -> ()
    %cst_26 = arith.constant dense<0xFF800000> : vector<2x8xf32>
    %54 = vector.multi_reduction <maximumf>, %53, %cst_26 [2] : vector<2x8x8xf32> to vector<2x8xf32>
    %55 = vector.shape_cast %54 : vector<2x8xf32> to vector<2x8x1xf32>
    %56 = vector.broadcast %55 : vector<2x8x1xf32> to vector<2x8x8xf32>
    %57 = arith.subf %53, %56 : vector<2x8x8xf32>
    %58 = math.exp %57 : vector<2x8x8xf32>
    %cst_27 = arith.constant dense<0.000000e+00> : vector<2x8xf32>
    %59 = vector.multi_reduction <add>, %58, %cst_27 [2] : vector<2x8x8xf32> to vector<2x8xf32>
    %60 = vector.shape_cast %59 : vector<2x8xf32> to vector<2x8x1xf32>
    %61 = vector.broadcast %60 : vector<2x8x1xf32> to vector<2x8x8xf32>
    %62 = arith.divf %58, %61 : vector<2x8x8xf32>
    %63 = arith.truncf %62 : vector<2x8x8xf32> to vector<2x8x8xbf16>
    %64 = arith.truncf %50 : vector<2x8x8xf32> to vector<2x8x8xbf16>
    "tpu.trace_start"() <{level = 10 : i32, message = "bnm,bmd->bnd"}> : () -> ()
    %cst_28 = arith.constant dense<0.000000e+00> : vector<2x8x8xf32>
    %65 = tpu.matmul %63, %64, %cst_28 {dimension_numbers = #tpu.dot_dimension_numbers<[2], [1], [1], [2], [0, 0, 0, 1, 1, 2], [0], [0]>} : vector<2x8x8xbf16>, vector<2x8x8xbf16>, vector<2x8x8xf32> -> vector<2x8x8xf32>
    "tpu.trace_stop"() : () -> ()
    %66 = vector.shape_cast %65 : vector<2x8x8xf32> to vector<16x8xf32>
    %67 = arith.truncf %66 : vector<16x8xf32> to vector<16x8xbf16>
    %c0_29 = arith.constant 0 : index
    %c0_30 = arith.constant 0 : index
    %c0_31 = arith.constant 0 : index
    %68 = vector.load %arg3[%c0_29, %c0_30, %c0_31] : memref<4x8x32xbf16, #tpu.memory_space<vmem>>, vector<1x8x32xbf16>
    %69 = vector.shape_cast %68 : vector<1x8x32xbf16> to vector<8x32xbf16>
    %cst_32 = arith.constant dense<0.000000e+00> : vector<16x32xf32>
    %70 = tpu.matmul %67, %69, %cst_32 {dimension_numbers = #tpu.dot_dimension_numbers<[1], [0], [0], [1], [0, 0, 1, 1], [], []>} : vector<16x8xbf16>, vector<8x32xbf16>, vector<16x32xf32> -> vector<16x32xf32>
    %71 = arith.addf %27, %70 : vector<16x32xf32>
    %c2_33 = arith.constant 2 : index
    %c8_34 = arith.constant 8 : index
    %72 = vector.load %arg1[%c2_33, %c8_34] : memref<16x128xf32, #tpu.memory_space<vmem>>, vector<1x8xf32>
    %c3_35 = arith.constant 3 : index
    %c8_36 = arith.constant 8 : index
    %73 = vector.load %arg1[%c3_35, %c8_36] : memref<16x128xf32, #tpu.memory_space<vmem>>, vector<1x8xf32>
    %c4_37 = arith.constant 4 : index
    %c8_38 = arith.constant 8 : index
    %74 = vector.load %arg1[%c4_37, %c8_38] : memref<16x128xf32, #tpu.memory_space<vmem>>, vector<1x8xf32>
    %c1_39 = arith.constant 1 : index
    %c0_40 = arith.constant 0 : index
    %c0_41 = arith.constant 0 : index
    %75 = vector.load %arg2[%c1_39, %c0_40, %c0_41] : memref<12x32x8xbf16, #tpu.memory_space<vmem>>, vector<1x32x8xbf16>
    %76 = vector.shape_cast %75 : vector<1x32x8xbf16> to vector<32x8xbf16>
    %cst_42 = arith.constant dense<0.000000e+00> : vector<16x8xf32>
    %77 = tpu.matmul %26, %76, %cst_42 {dimension_numbers = #tpu.dot_dimension_numbers<[1], [0], [0], [1], [0, 0, 1, 1], [], []>} : vector<16x32xbf16>, vector<32x8xbf16>, vector<16x8xf32> -> vector<16x8xf32>
    %78 = vector.broadcast %72 : vector<1x8xf32> to vector<16x8xf32>
    %79 = arith.addf %77, %78 : vector<16x8xf32>
    %c5 = arith.constant 5 : index
    %c0_43 = arith.constant 0 : index
    %c0_44 = arith.constant 0 : index
    %80 = vector.load %arg2[%c5, %c0_43, %c0_44] : memref<12x32x8xbf16, #tpu.memory_space<vmem>>, vector<1x32x8xbf16>
    %81 = vector.shape_cast %80 : vector<1x32x8xbf16> to vector<32x8xbf16>
    %cst_45 = arith.constant dense<0.000000e+00> : vector<16x8xf32>
    %82 = tpu.matmul %26, %81, %cst_45 {dimension_numbers = #tpu.dot_dimension_numbers<[1], [0], [0], [1], [0, 0, 1, 1], [], []>} : vector<16x32xbf16>, vector<32x8xbf16>, vector<16x8xf32> -> vector<16x8xf32>
    %83 = vector.broadcast %73 : vector<1x8xf32> to vector<16x8xf32>
    %84 = arith.addf %82, %83 : vector<16x8xf32>
    %c9 = arith.constant 9 : index
    %c0_46 = arith.constant 0 : index
    %c0_47 = arith.constant 0 : index
    %85 = vector.load %arg2[%c9, %c0_46, %c0_47] : memref<12x32x8xbf16, #tpu.memory_space<vmem>>, vector<1x32x8xbf16>
    %86 = vector.shape_cast %85 : vector<1x32x8xbf16> to vector<32x8xbf16>
    %cst_48 = arith.constant dense<0.000000e+00> : vector<16x8xf32>
    %87 = tpu.matmul %26, %86, %cst_48 {dimension_numbers = #tpu.dot_dimension_numbers<[1], [0], [0], [1], [0, 0, 1, 1], [], []>} : vector<16x32xbf16>, vector<32x8xbf16>, vector<16x8xf32> -> vector<16x8xf32>
    %88 = vector.broadcast %74 : vector<1x8xf32> to vector<16x8xf32>
    %89 = arith.addf %87, %88 : vector<16x8xf32>
    %cst_49 = arith.constant 0.353553385 : f32
    %90 = vector.broadcast %cst_49 : f32 to vector<16x8xf32>
    %91 = arith.mulf %79, %90 : vector<16x8xf32>
    %92 = vector.shape_cast %91 : vector<16x8xf32> to vector<2x8x8xf32>
    %93 = vector.shape_cast %84 : vector<16x8xf32> to vector<2x8x8xf32>
    %94 = vector.shape_cast %89 : vector<16x8xf32> to vector<2x8x8xf32>
    %95 = arith.truncf %92 : vector<2x8x8xf32> to vector<2x8x8xbf16>
    %96 = arith.truncf %93 : vector<2x8x8xf32> to vector<2x8x8xbf16>
    "tpu.trace_start"() <{level = 10 : i32, message = "bnd,bmd->bnm"}> : () -> ()
    %cst_50 = arith.constant dense<0.000000e+00> : vector<2x8x8xf32>
    %97 = tpu.matmul %95, %96, %cst_50 {dimension_numbers = #tpu.dot_dimension_numbers<[2], [2], [1], [1], [0, 0, 0, 1, 1, 1], [0], [0]>} : vector<2x8x8xbf16>, vector<2x8x8xbf16>, vector<2x8x8xf32> -> vector<2x8x8xf32>
    "tpu.trace_stop"() : () -> ()
    %cst_51 = arith.constant dense<0xFF800000> : vector<2x8xf32>
    %98 = vector.multi_reduction <maximumf>, %97, %cst_51 [2] : vector<2x8x8xf32> to vector<2x8xf32>
    %99 = vector.shape_cast %98 : vector<2x8xf32> to vector<2x8x1xf32>
    %100 = vector.broadcast %99 : vector<2x8x1xf32> to vector<2x8x8xf32>
    %101 = arith.subf %97, %100 : vector<2x8x8xf32>
    %102 = math.exp %101 : vector<2x8x8xf32>
    %cst_52 = arith.constant dense<0.000000e+00> : vector<2x8xf32>
    %103 = vector.multi_reduction <add>, %102, %cst_52 [2] : vector<2x8x8xf32> to vector<2x8xf32>
    %104 = vector.shape_cast %103 : vector<2x8xf32> to vector<2x8x1xf32>
    %105 = vector.broadcast %104 : vector<2x8x1xf32> to vector<2x8x8xf32>
    %106 = arith.divf %102, %105 : vector<2x8x8xf32>
    %107 = arith.truncf %106 : vector<2x8x8xf32> to vector<2x8x8xbf16>
    %108 = arith.truncf %94 : vector<2x8x8xf32> to vector<2x8x8xbf16>
    "tpu.trace_start"() <{level = 10 : i32, message = "bnm,bmd->bnd"}> : () -> ()
    %cst_53 = arith.constant dense<0.000000e+00> : vector<2x8x8xf32>
    %109 = tpu.matmul %107, %108, %cst_53 {dimension_numbers = #tpu.dot_dimension_numbers<[2], [1], [1], [2], [0, 0, 0, 1, 1, 2], [0], [0]>} : vector<2x8x8xbf16>, vector<2x8x8xbf16>, vector<2x8x8xf32> -> vector<2x8x8xf32>
    "tpu.trace_stop"() : () -> ()
    %110 = vector.shape_cast %109 : vector<2x8x8xf32> to vector<16x8xf32>
    %111 = arith.truncf %110 : vector<16x8xf32> to vector<16x8xbf16>
    %c1_54 = arith.constant 1 : index
    %c0_55 = arith.constant 0 : index
    %c0_56 = arith.constant 0 : index
    %112 = vector.load %arg3[%c1_54, %c0_55, %c0_56] : memref<4x8x32xbf16, #tpu.memory_space<vmem>>, vector<1x8x32xbf16>
    %113 = vector.shape_cast %112 : vector<1x8x32xbf16> to vector<8x32xbf16>
    %cst_57 = arith.constant dense<0.000000e+00> : vector<16x32xf32>
    %114 = tpu.matmul %111, %113, %cst_57 {dimension_numbers = #tpu.dot_dimension_numbers<[1], [0], [0], [1], [0, 0, 1, 1], [], []>} : vector<16x8xbf16>, vector<8x32xbf16>, vector<16x32xf32> -> vector<16x32xf32>
    %115 = arith.addf %71, %114 : vector<16x32xf32>
    %c2_58 = arith.constant 2 : index
    %c16 = arith.constant 16 : index
    %116 = vector.load %arg1[%c2_58, %c16] : memref<16x128xf32, #tpu.memory_space<vmem>>, vector<1x8xf32>
    %c3_59 = arith.constant 3 : index
    %c16_60 = arith.constant 16 : index
    %117 = vector.load %arg1[%c3_59, %c16_60] : memref<16x128xf32, #tpu.memory_space<vmem>>, vector<1x8xf32>
    %c4_61 = arith.constant 4 : index
    %c16_62 = arith.constant 16 : index
    %118 = vector.load %arg1[%c4_61, %c16_62] : memref<16x128xf32, #tpu.memory_space<vmem>>, vector<1x8xf32>
    %c2_63 = arith.constant 2 : index
    %c0_64 = arith.constant 0 : index
    %c0_65 = arith.constant 0 : index
    %119 = vector.load %arg2[%c2_63, %c0_64, %c0_65] : memref<12x32x8xbf16, #tpu.memory_space<vmem>>, vector<1x32x8xbf16>
    %120 = vector.shape_cast %119 : vector<1x32x8xbf16> to vector<32x8xbf16>
    %cst_66 = arith.constant dense<0.000000e+00> : vector<16x8xf32>
    %121 = tpu.matmul %26, %120, %cst_66 {dimension_numbers = #tpu.dot_dimension_numbers<[1], [0], [0], [1], [0, 0, 1, 1], [], []>} : vector<16x32xbf16>, vector<32x8xbf16>, vector<16x8xf32> -> vector<16x8xf32>
    %122 = vector.broadcast %116 : vector<1x8xf32> to vector<16x8xf32>
    %123 = arith.addf %121, %122 : vector<16x8xf32>
    %c6 = arith.constant 6 : index
    %c0_67 = arith.constant 0 : index
    %c0_68 = arith.constant 0 : index
    %124 = vector.load %arg2[%c6, %c0_67, %c0_68] : memref<12x32x8xbf16, #tpu.memory_space<vmem>>, vector<1x32x8xbf16>
    %125 = vector.shape_cast %124 : vector<1x32x8xbf16> to vector<32x8xbf16>
    %cst_69 = arith.constant dense<0.000000e+00> : vector<16x8xf32>
    %126 = tpu.matmul %26, %125, %cst_69 {dimension_numbers = #tpu.dot_dimension_numbers<[1], [0], [0], [1], [0, 0, 1, 1], [], []>} : vector<16x32xbf16>, vector<32x8xbf16>, vector<16x8xf32> -> vector<16x8xf32>
    %127 = vector.broadcast %117 : vector<1x8xf32> to vector<16x8xf32>
    %128 = arith.addf %126, %127 : vector<16x8xf32>
    %c10 = arith.constant 10 : index
    %c0_70 = arith.constant 0 : index
    %c0_71 = arith.constant 0 : index
    %129 = vector.load %arg2[%c10, %c0_70, %c0_71] : memref<12x32x8xbf16, #tpu.memory_space<vmem>>, vector<1x32x8xbf16>
    %130 = vector.shape_cast %129 : vector<1x32x8xbf16> to vector<32x8xbf16>
    %cst_72 = arith.constant dense<0.000000e+00> : vector<16x8xf32>
    %131 = tpu.matmul %26, %130, %cst_72 {dimension_numbers = #tpu.dot_dimension_numbers<[1], [0], [0], [1], [0, 0, 1, 1], [], []>} : vector<16x32xbf16>, vector<32x8xbf16>, vector<16x8xf32> -> vector<16x8xf32>
    %132 = vector.broadcast %118 : vector<1x8xf32> to vector<16x8xf32>
    %133 = arith.addf %131, %132 : vector<16x8xf32>
    %cst_73 = arith.constant 0.353553385 : f32
    %134 = vector.broadcast %cst_73 : f32 to vector<16x8xf32>
    %135 = arith.mulf %123, %134 : vector<16x8xf32>
    %136 = vector.shape_cast %135 : vector<16x8xf32> to vector<2x8x8xf32>
    %137 = vector.shape_cast %128 : vector<16x8xf32> to vector<2x8x8xf32>
    %138 = vector.shape_cast %133 : vector<16x8xf32> to vector<2x8x8xf32>
    %139 = arith.truncf %136 : vector<2x8x8xf32> to vector<2x8x8xbf16>
    %140 = arith.truncf %137 : vector<2x8x8xf32> to vector<2x8x8xbf16>
    "tpu.trace_start"() <{level = 10 : i32, message = "bnd,bmd->bnm"}> : () -> ()
    %cst_74 = arith.constant dense<0.000000e+00> : vector<2x8x8xf32>
    %141 = tpu.matmul %139, %140, %cst_74 {dimension_numbers = #tpu.dot_dimension_numbers<[2], [2], [1], [1], [0, 0, 0, 1, 1, 1], [0], [0]>} : vector<2x8x8xbf16>, vector<2x8x8xbf16>, vector<2x8x8xf32> -> vector<2x8x8xf32>
    "tpu.trace_stop"() : () -> ()
    %cst_75 = arith.constant dense<0xFF800000> : vector<2x8xf32>
    %142 = vector.multi_reduction <maximumf>, %141, %cst_75 [2] : vector<2x8x8xf32> to vector<2x8xf32>
    %143 = vector.shape_cast %142 : vector<2x8xf32> to vector<2x8x1xf32>
    %144 = vector.broadcast %143 : vector<2x8x1xf32> to vector<2x8x8xf32>
    %145 = arith.subf %141, %144 : vector<2x8x8xf32>
    %146 = math.exp %145 : vector<2x8x8xf32>
    %cst_76 = arith.constant dense<0.000000e+00> : vector<2x8xf32>
    %147 = vector.multi_reduction <add>, %146, %cst_76 [2] : vector<2x8x8xf32> to vector<2x8xf32>
    %148 = vector.shape_cast %147 : vector<2x8xf32> to vector<2x8x1xf32>
    %149 = vector.broadcast %148 : vector<2x8x1xf32> to vector<2x8x8xf32>
    %150 = arith.divf %146, %149 : vector<2x8x8xf32>
    %151 = arith.truncf %150 : vector<2x8x8xf32> to vector<2x8x8xbf16>
    %152 = arith.truncf %138 : vector<2x8x8xf32> to vector<2x8x8xbf16>
    "tpu.trace_start"() <{level = 10 : i32, message = "bnm,bmd->bnd"}> : () -> ()
    %cst_77 = arith.constant dense<0.000000e+00> : vector<2x8x8xf32>
    %153 = tpu.matmul %151, %152, %cst_77 {dimension_numbers = #tpu.dot_dimension_numbers<[2], [1], [1], [2], [0, 0, 0, 1, 1, 2], [0], [0]>} : vector<2x8x8xbf16>, vector<2x8x8xbf16>, vector<2x8x8xf32> -> vector<2x8x8xf32>
    "tpu.trace_stop"() : () -> ()
    %154 = vector.shape_cast %153 : vector<2x8x8xf32> to vector<16x8xf32>
    %155 = arith.truncf %154 : vector<16x8xf32> to vector<16x8xbf16>
    %c2_78 = arith.constant 2 : index
    %c0_79 = arith.constant 0 : index
    %c0_80 = arith.constant 0 : index
    %156 = vector.load %arg3[%c2_78, %c0_79, %c0_80] : memref<4x8x32xbf16, #tpu.memory_space<vmem>>, vector<1x8x32xbf16>
    %157 = vector.shape_cast %156 : vector<1x8x32xbf16> to vector<8x32xbf16>
    %cst_81 = arith.constant dense<0.000000e+00> : vector<16x32xf32>
    %158 = tpu.matmul %155, %157, %cst_81 {dimension_numbers = #tpu.dot_dimension_numbers<[1], [0], [0], [1], [0, 0, 1, 1], [], []>} : vector<16x8xbf16>, vector<8x32xbf16>, vector<16x32xf32> -> vector<16x32xf32>
    %159 = arith.addf %115, %158 : vector<16x32xf32>
    %c2_82 = arith.constant 2 : index
    %c24 = arith.constant 24 : index
    %160 = vector.load %arg1[%c2_82, %c24] : memref<16x128xf32, #tpu.memory_space<vmem>>, vector<1x8xf32>
    %c3_83 = arith.constant 3 : index
    %c24_84 = arith.constant 24 : index
    %161 = vector.load %arg1[%c3_83, %c24_84] : memref<16x128xf32, #tpu.memory_space<vmem>>, vector<1x8xf32>
    %c4_85 = arith.constant 4 : index
    %c24_86 = arith.constant 24 : index
    %162 = vector.load %arg1[%c4_85, %c24_86] : memref<16x128xf32, #tpu.memory_space<vmem>>, vector<1x8xf32>
    %c3_87 = arith.constant 3 : index
    %c0_88 = arith.constant 0 : index
    %c0_89 = arith.constant 0 : index
    %163 = vector.load %arg2[%c3_87, %c0_88, %c0_89] : memref<12x32x8xbf16, #tpu.memory_space<vmem>>, vector<1x32x8xbf16>
    %164 = vector.shape_cast %163 : vector<1x32x8xbf16> to vector<32x8xbf16>
    %cst_90 = arith.constant dense<0.000000e+00> : vector<16x8xf32>
    %165 = tpu.matmul %26, %164, %cst_90 {dimension_numbers = #tpu.dot_dimension_numbers<[1], [0], [0], [1], [0, 0, 1, 1], [], []>} : vector<16x32xbf16>, vector<32x8xbf16>, vector<16x8xf32> -> vector<16x8xf32>
    %166 = vector.broadcast %160 : vector<1x8xf32> to vector<16x8xf32>
    %167 = arith.addf %165, %166 : vector<16x8xf32>
    %c7 = arith.constant 7 : index
    %c0_91 = arith.constant 0 : index
    %c0_92 = arith.constant 0 : index
    %168 = vector.load %arg2[%c7, %c0_91, %c0_92] : memref<12x32x8xbf16, #tpu.memory_space<vmem>>, vector<1x32x8xbf16>
    %169 = vector.shape_cast %168 : vector<1x32x8xbf16> to vector<32x8xbf16>
    %cst_93 = arith.constant dense<0.000000e+00> : vector<16x8xf32>
    %170 = tpu.matmul %26, %169, %cst_93 {dimension_numbers = #tpu.dot_dimension_numbers<[1], [0], [0], [1], [0, 0, 1, 1], [], []>} : vector<16x32xbf16>, vector<32x8xbf16>, vector<16x8xf32> -> vector<16x8xf32>
    %171 = vector.broadcast %161 : vector<1x8xf32> to vector<16x8xf32>
    %172 = arith.addf %170, %171 : vector<16x8xf32>
    %c11 = arith.constant 11 : index
    %c0_94 = arith.constant 0 : index
    %c0_95 = arith.constant 0 : index
    %173 = vector.load %arg2[%c11, %c0_94, %c0_95] : memref<12x32x8xbf16, #tpu.memory_space<vmem>>, vector<1x32x8xbf16>
    %174 = vector.shape_cast %173 : vector<1x32x8xbf16> to vector<32x8xbf16>
    %cst_96 = arith.constant dense<0.000000e+00> : vector<16x8xf32>
    %175 = tpu.matmul %26, %174, %cst_96 {dimension_numbers = #tpu.dot_dimension_numbers<[1], [0], [0], [1], [0, 0, 1, 1], [], []>} : vector<16x32xbf16>, vector<32x8xbf16>, vector<16x8xf32> -> vector<16x8xf32>
    %176 = vector.broadcast %162 : vector<1x8xf32> to vector<16x8xf32>
    %177 = arith.addf %175, %176 : vector<16x8xf32>
    %cst_97 = arith.constant 0.353553385 : f32
    %178 = vector.broadcast %cst_97 : f32 to vector<16x8xf32>
    %179 = arith.mulf %167, %178 : vector<16x8xf32>
    %180 = vector.shape_cast %179 : vector<16x8xf32> to vector<2x8x8xf32>
    %181 = vector.shape_cast %172 : vector<16x8xf32> to vector<2x8x8xf32>
    %182 = vector.shape_cast %177 : vector<16x8xf32> to vector<2x8x8xf32>
    %183 = arith.truncf %180 : vector<2x8x8xf32> to vector<2x8x8xbf16>
    %184 = arith.truncf %181 : vector<2x8x8xf32> to vector<2x8x8xbf16>
    "tpu.trace_start"() <{level = 10 : i32, message = "bnd,bmd->bnm"}> : () -> ()
    %cst_98 = arith.constant dense<0.000000e+00> : vector<2x8x8xf32>
    %185 = tpu.matmul %183, %184, %cst_98 {dimension_numbers = #tpu.dot_dimension_numbers<[2], [2], [1], [1], [0, 0, 0, 1, 1, 1], [0], [0]>} : vector<2x8x8xbf16>, vector<2x8x8xbf16>, vector<2x8x8xf32> -> vector<2x8x8xf32>
    "tpu.trace_stop"() : () -> ()
    %cst_99 = arith.constant dense<0xFF800000> : vector<2x8xf32>
    %186 = vector.multi_reduction <maximumf>, %185, %cst_99 [2] : vector<2x8x8xf32> to vector<2x8xf32>
    %187 = vector.shape_cast %186 : vector<2x8xf32> to vector<2x8x1xf32>
    %188 = vector.broadcast %187 : vector<2x8x1xf32> to vector<2x8x8xf32>
    %189 = arith.subf %185, %188 : vector<2x8x8xf32>
    %190 = math.exp %189 : vector<2x8x8xf32>
    %cst_100 = arith.constant dense<0.000000e+00> : vector<2x8xf32>
    %191 = vector.multi_reduction <add>, %190, %cst_100 [2] : vector<2x8x8xf32> to vector<2x8xf32>
    %192 = vector.shape_cast %191 : vector<2x8xf32> to vector<2x8x1xf32>
    %193 = vector.broadcast %192 : vector<2x8x1xf32> to vector<2x8x8xf32>
    %194 = arith.divf %190, %193 : vector<2x8x8xf32>
    %195 = arith.truncf %194 : vector<2x8x8xf32> to vector<2x8x8xbf16>
    %196 = arith.truncf %182 : vector<2x8x8xf32> to vector<2x8x8xbf16>
    "tpu.trace_start"() <{level = 10 : i32, message = "bnm,bmd->bnd"}> : () -> ()
    %cst_101 = arith.constant dense<0.000000e+00> : vector<2x8x8xf32>
    %197 = tpu.matmul %195, %196, %cst_101 {dimension_numbers = #tpu.dot_dimension_numbers<[2], [1], [1], [2], [0, 0, 0, 1, 1, 2], [0], [0]>} : vector<2x8x8xbf16>, vector<2x8x8xbf16>, vector<2x8x8xf32> -> vector<2x8x8xf32>
    "tpu.trace_stop"() : () -> ()
    %198 = vector.shape_cast %197 : vector<2x8x8xf32> to vector<16x8xf32>
    %199 = arith.truncf %198 : vector<16x8xf32> to vector<16x8xbf16>
    %c3_102 = arith.constant 3 : index
    %c0_103 = arith.constant 0 : index
    %c0_104 = arith.constant 0 : index
    %200 = vector.load %arg3[%c3_102, %c0_103, %c0_104] : memref<4x8x32xbf16, #tpu.memory_space<vmem>>, vector<1x8x32xbf16>
    %201 = vector.shape_cast %200 : vector<1x8x32xbf16> to vector<8x32xbf16>
    %cst_105 = arith.constant dense<0.000000e+00> : vector<16x32xf32>
    %202 = tpu.matmul %199, %201, %cst_105 {dimension_numbers = #tpu.dot_dimension_numbers<[1], [0], [0], [1], [0, 0, 1, 1], [], []>} : vector<16x8xbf16>, vector<8x32xbf16>, vector<16x32xf32> -> vector<16x32xf32>
    %203 = arith.addf %159, %202 : vector<16x32xf32>
    %c5_106 = arith.constant 5 : index
    %c0_107 = arith.constant 0 : index
    %204 = vector.load %arg1[%c5_106, %c0_107] : memref<16x128xf32, #tpu.memory_space<vmem>>, vector<1x32xf32>
    %205 = vector.broadcast %204 : vector<1x32xf32> to vector<16x32xf32>
    %206 = arith.addf %203, %205 : vector<16x32xf32>
    %207 = arith.addf %1, %206 : vector<16x32xf32>
    %c6_108 = arith.constant 6 : index
    %c0_109 = arith.constant 0 : index
    %208 = vector.load %arg1[%c6_108, %c0_109] : memref<16x128xf32, #tpu.memory_space<vmem>>, vector<1x32xf32>
    %c7_110 = arith.constant 7 : index
    %c0_111 = arith.constant 0 : index
    %209 = vector.load %arg1[%c7_110, %c0_111] : memref<16x128xf32, #tpu.memory_space<vmem>>, vector<1x32xf32>
    %cst_112 = arith.constant dense<0.000000e+00> : vector<16xf32>
    %210 = vector.multi_reduction <add>, %207, %cst_112 [1] : vector<16x32xf32> to vector<16xf32>
    %211 = vector.shape_cast %210 : vector<16xf32> to vector<16x1xf32>
    %cst_113 = arith.constant 3.200000e+01 : f32
    %212 = vector.broadcast %cst_113 : f32 to vector<16x1xf32>
    %213 = arith.divf %211, %212 : vector<16x1xf32>
    %214 = vector.broadcast %213 : vector<16x1xf32> to vector<16x32xf32>
    %215 = arith.subf %207, %214 : vector<16x32xf32>
    %216 = arith.mulf %215, %215 : vector<16x32xf32>
    %cst_114 = arith.constant dense<0.000000e+00> : vector<16xf32>
    %217 = vector.multi_reduction <add>, %216, %cst_114 [1] : vector<16x32xf32> to vector<16xf32>
    %218 = vector.shape_cast %217 : vector<16xf32> to vector<16x1xf32>
    %cst_115 = arith.constant 3.200000e+01 : f32
    %219 = vector.broadcast %cst_115 : f32 to vector<16x1xf32>
    %220 = arith.divf %218, %219 : vector<16x1xf32>
    %221 = vector.broadcast %213 : vector<16x1xf32> to vector<16x32xf32>
    %222 = arith.subf %207, %221 : vector<16x32xf32>
    %cst_116 = arith.constant 9.99999974E-6 : f32
    %223 = vector.broadcast %cst_116 : f32 to vector<16x1xf32>
    %224 = arith.addf %220, %223 : vector<16x1xf32>
    %225 = math.rsqrt %224 : vector<16x1xf32>
    %226 = vector.broadcast %225 : vector<16x1xf32> to vector<16x32xf32>
    %227 = arith.mulf %222, %226 : vector<16x32xf32>
    %228 = vector.broadcast %208 : vector<1x32xf32> to vector<16x32xf32>
    %229 = arith.mulf %227, %228 : vector<16x32xf32>
    %230 = vector.broadcast %209 : vector<1x32xf32> to vector<16x32xf32>
    %231 = arith.addf %229, %230 : vector<16x32xf32>
    %232 = arith.truncf %231 : vector<16x32xf32> to vector<16x32xbf16>
    %c0_117 = arith.constant 0 : index
    %c0_118 = arith.constant 0 : index
    %233 = vector.load %arg4[%c0_117, %c0_118] : memref<32x128xbf16, #tpu.memory_space<vmem>>, vector<32x128xbf16>
    %cst_119 = arith.constant dense<0.000000e+00> : vector<16x128xf32>
    %234 = tpu.matmul %232, %233, %cst_119 {dimension_numbers = #tpu.dot_dimension_numbers<[1], [0], [0], [1], [0, 0, 1, 1], [], []>} : vector<16x32xbf16>, vector<32x128xbf16>, vector<16x128xf32> -> vector<16x128xf32>
    %c8_120 = arith.constant 8 : index
    %c0_121 = arith.constant 0 : index
    %235 = vector.load %arg1[%c8_120, %c0_121] : memref<16x128xf32, #tpu.memory_space<vmem>>, vector<1x128xf32>
    %236 = vector.broadcast %235 : vector<1x128xf32> to vector<16x128xf32>
    %237 = arith.addf %234, %236 : vector<16x128xf32>
    %cst_122 = arith.constant 5.000000e-01 : f32
    %238 = vector.broadcast %cst_122 : f32 to vector<16x128xf32>
    %239 = arith.mulf %238, %237 : vector<16x128xf32>
    %cst_123 = arith.constant 0.707106769 : f32
    %240 = vector.broadcast %cst_123 : f32 to vector<16x128xf32>
    %241 = arith.mulf %237, %240 : vector<16x128xf32>
    %242 = math.absf %241 : vector<16x128xf32>
    %cst_124 = arith.constant 0.327591091 : f32
    %243 = vector.broadcast %cst_124 : f32 to vector<16x128xf32>
    %244 = arith.mulf %243, %242 : vector<16x128xf32>
    %cst_125 = arith.constant 1.000000e+00 : f32
    %245 = vector.broadcast %cst_125 : f32 to vector<16x128xf32>
    %246 = arith.addf %245, %244 : vector<16x128xf32>
    %cst_126 = arith.constant 1.000000e+00 : f32
    %247 = vector.broadcast %cst_126 : f32 to vector<16x128xf32>
    %248 = arith.divf %247, %246 : vector<16x128xf32>
    %cst_127 = arith.constant 1.06140542 : f32
    %249 = vector.broadcast %cst_127 : f32 to vector<16x128xf32>
    %250 = arith.mulf %249, %248 : vector<16x128xf32>
    %cst_128 = arith.constant -1.45315206 : f32
    %251 = vector.broadcast %cst_128 : f32 to vector<16x128xf32>
    %252 = arith.addf %250, %251 : vector<16x128xf32>
    %253 = arith.mulf %252, %248 : vector<16x128xf32>
    %cst_129 = arith.constant 1.42141378 : f32
    %254 = vector.broadcast %cst_129 : f32 to vector<16x128xf32>
    %255 = arith.addf %253, %254 : vector<16x128xf32>
    %256 = arith.mulf %255, %248 : vector<16x128xf32>
    %cst_130 = arith.constant -0.284496725 : f32
    %257 = vector.broadcast %cst_130 : f32 to vector<16x128xf32>
    %258 = arith.addf %256, %257 : vector<16x128xf32>
    %259 = arith.mulf %258, %248 : vector<16x128xf32>
    %cst_131 = arith.constant 0.254829586 : f32
    %260 = vector.broadcast %cst_131 : f32 to vector<16x128xf32>
    %261 = arith.addf %259, %260 : vector<16x128xf32>
    %262 = arith.mulf %261, %248 : vector<16x128xf32>
    %263 = arith.mulf %241, %241 : vector<16x128xf32>
    %cst_132 = arith.constant 0.000000e+00 : f32
    %264 = vector.broadcast %cst_132 : f32 to vector<16x128xf32>
    %265 = arith.subf %264, %263 : vector<16x128xf32>
    %266 = math.exp %265 : vector<16x128xf32>
    %267 = arith.mulf %262, %266 : vector<16x128xf32>
    %cst_133 = arith.constant 1.000000e+00 : f32
    %268 = vector.broadcast %cst_133 : f32 to vector<16x128xf32>
    %269 = arith.subf %268, %267 : vector<16x128xf32>
    %cst_134 = arith.constant 0.000000e+00 : f32
    %270 = vector.broadcast %cst_134 : f32 to vector<16x128xf32>
    %271 = arith.cmpf olt, %241, %270 : vector<16x128xf32>
    %cst_135 = arith.constant 0.000000e+00 : f32
    %272 = vector.broadcast %cst_135 : f32 to vector<16x128xf32>
    %273 = arith.subf %272, %269 : vector<16x128xf32>
    %274 = arith.select %271, %273, %269 : vector<16x128xi1>, vector<16x128xf32>
    %cst_136 = arith.constant 1.000000e+00 : f32
    %275 = vector.broadcast %cst_136 : f32 to vector<16x128xf32>
    %276 = arith.addf %275, %274 : vector<16x128xf32>
    %277 = arith.mulf %239, %276 : vector<16x128xf32>
    %278 = arith.truncf %277 : vector<16x128xf32> to vector<16x128xbf16>
    %c0_137 = arith.constant 0 : index
    %c0_138 = arith.constant 0 : index
    %279 = vector.load %arg5[%c0_137, %c0_138] : memref<128x32xbf16, #tpu.memory_space<vmem>>, vector<128x32xbf16>
    %cst_139 = arith.constant dense<0.000000e+00> : vector<16x32xf32>
    %280 = tpu.matmul %278, %279, %cst_139 {dimension_numbers = #tpu.dot_dimension_numbers<[1], [0], [0], [1], [0, 0, 1, 1], [], []>} : vector<16x128xbf16>, vector<128x32xbf16>, vector<16x32xf32> -> vector<16x32xf32>
    %c9_140 = arith.constant 9 : index
    %c0_141 = arith.constant 0 : index
    %281 = vector.load %arg1[%c9_140, %c0_141] : memref<16x128xf32, #tpu.memory_space<vmem>>, vector<1x32xf32>
    %282 = vector.broadcast %281 : vector<1x32xf32> to vector<16x32xf32>
    %283 = arith.addf %280, %282 : vector<16x32xf32>
    %284 = arith.addf %207, %283 : vector<16x32xf32>
    %285 = vector.shape_cast %284 : vector<16x32xf32> to vector<2x8x32xf32>
    %c0_142 = arith.constant 0 : index
    %c0_143 = arith.constant 0 : index
    %c0_144 = arith.constant 0 : index
    %286 = vector.load %arg6[%c0_142, %c0_143, %c0_144] : memref<2x8x32xf32, #tpu.memory_space<vmem>>, vector<2x8x32xf32>
    tpu.vector_store %arg6[%c0_142, %c0_143, %c0_144], %285 {strides = array<i32>} : memref<2x8x32xf32, #tpu.memory_space<vmem>>, vector<2x8x32xf32>,
    return
  }
}

</mosaic_0001>

<llo_original>
// kernel: tpu_custom_call.1
$region0: #{tpu_custom_call.1}
  #allocation0 [shape = 'u32[]', space=smem, size = 0x4, offset = 0x4, fixed_abs, tag = 'smem constant byte address 0x4 - core index']
  #allocation1 [shape = 'u32[144,128]{1,0:T(1,128)}', space=vmem, size = 0x12000, scoped, tag = 'internal scratch']
  %s0 = inlined_call_operand.vmem [shape: f32[2,8,32], index: 0, kind: input, shape index: {}]
  %s1 = inlined_call_operand.vmem [shape: f32[16,128], index: 1, kind: input, shape index: {}]
  %s2 = inlined_call_operand.vmem [shape: bf16[12,32,8], index: 2, kind: input, shape index: {}]
  %s3 = inlined_call_operand.vmem [shape: bf16[4,8,32], index: 3, kind: input, shape index: {}]
  %s4 = inlined_call_operand.vmem [shape: bf16[32,128], index: 4, kind: input, shape index: {}]
  %s5 = inlined_call_operand.vmem [shape: bf16[128,32], index: 5, kind: input, shape index: {}]
  %s6 = inlined_call_operand.hbm [shape: f32[2,8,32], index: 6, kind: output, shape index: {}]
  %s7 = sld [smem:[#allocation0]]
  $region34: #{tpu_custom_call.1} parent=0
    _
  %s9 = ssub.s32 1, %s7
  %s10 = scalar_select 0, %s9, %s7
  $region1: #{tpu_custom_call.1} parent=0
    #allocation2 [shape = 'u8[8192]{0}', space=vmem, size = 0x2000, scoped, tag = 'output window, operand 0, single buffered']
    #allocation3 [shape = 's32[1]{0}', space=sflag, size = 0x4, scoped, tag = 'scoped memory for tpu_custom_call.1']
    %11 = vsyncpa [#allocation3], 0
    // Predicated region
    $region2: #{tpu_custom_call.1} parent=1 // pred_check
      _
    $region3: #{tpu_custom_call.1} parent=1 // pred_check_branch
      %13 = sbr.rel (0) target = $region5
    $region4: #{tpu_custom_call.1} parent=1 // pred_region
      _
    $region5: #{tpu_custom_call.1} parent=1 // pred_fallthru
      _
    // Predicated region
    $region6: #{tpu_custom_call.1} parent=1 // pred_check
      _
    $region7: #{tpu_custom_call.1} parent=1 // pred_check_branch
      %15 = sbr.rel (0) target = $region9
    $region8: #{tpu_custom_call.1} parent=1 // pred_region
      _
    $region9: #{tpu_custom_call.1} parent=1 // pred_fallthru
      _
    // Predicated region
    $region10: #{tpu_custom_call.1} parent=1 // pred_check
      _
    $region11: #{tpu_custom_call.1} parent=1 // pred_check_branch
      %17 = sbr.rel (0) target = $region13
    $region12: #{tpu_custom_call.1} parent=1 // pred_region
      _
    $region13: #{tpu_custom_call.1} parent=1 // pred_fallthru
      _
    // Predicated region
    $region14: #{tpu_custom_call.1} parent=1 // pred_check
      _
    $region15: #{tpu_custom_call.1} parent=1 // pred_check_branch
      %19 = sbr.rel (0) target = $region17
    $region16: #{tpu_custom_call.1} parent=1 // pred_region
      _
    $region17: #{tpu_custom_call.1} parent=1 // pred_fallthru
      _
    // Predicated region
    $region18: #{tpu_custom_call.1} parent=1 // pred_check
      _
    $region19: #{tpu_custom_call.1} parent=1 // pred_check_branch
      %21 = sbr.rel (0) target = $region21
    $region20: #{tpu_custom_call.1} parent=1 // pred_region
      _
    $region21: #{tpu_custom_call.1} parent=1 // pred_fallthru
      _
    // Predicated region
    $region22: #{tpu_custom_call.1} parent=1 // pred_check
      _
    $region23: #{tpu_custom_call.1} parent=1 // pred_check_branch
      %23 = sbr.rel (0) target = $region25
    $region24: #{tpu_custom_call.1} parent=1 // pred_region
      _
    $region25: #{tpu_custom_call.1} parent=1 // pred_fallthru
      _
    %v25 = vld [vmem:[%s0] sm:$0xff]
    %v26 = vld [vmem:[%s0 + $0x8] sm:$0xff]
    %v27 = vld [vmem:[%s1] sm:$0x1]
    %v28 = vld [vmem:[%s1 + $0x1] sm:$0x1]
    %vm29 = vcmask 261120
    %v30 = vsel %vm29, %v25, 0.0
    %31 = vadd.xlane.f32.xlu0 %v30
    %v32 = vpop.xlane.xlu0 %31
    %v33 = vsel %vm29, %v26, 0.0
    %34 = vadd.xlane.f32.xlu0 %v33
    %v35 = vpop.xlane.xlu0 %34
    %v36 = vrcp.pop 32.0
    %v37 = vmul.f32 %v32, %v36
    %v38 = vmul.f32 %v35, %v36
    %v39 = vsub.f32 %v25, %v37
    %v40 = vsub.f32 %v26, %v38
    %v41 = vmul.f32 %v39, %v39
    %v42 = vmul.f32 %v40, %v40
    %v43 = vsel %vm29, %v41, 0.0
    %44 = vadd.xlane.f32.xlu0 %v43
    %v45 = vpop.xlane.xlu0 %44
    %v46 = vsel %vm29, %v42, 0.0
    %47 = vadd.xlane.f32.xlu0 %v46
    %v48 = vpop.xlane.xlu0 %47
    %v49 = vmul.f32 %v45, %v36
    %v50 = vmul.f32 %v48, %v36
    %v51 = vadd.f32 %v49, 1e-05
    %v52 = vadd.f32 %v50, 1e-05
    %v53 = vrsqrt.pop %v51
    %v54 = vrsqrt.pop %v52
    %v55 = vmul.f32 %v39, %v53
    %v56 = vmul.f32 %v40, %v54
    %v57 = vlaneseq
    %v58 = vshrl.u32 %v57, 7
    %v59 = vsub.s32 0, %v58
    %v60 = vrot.slane %v27, %v59
    %v61 = vmul.f32 %v55, %v60
    %v62 = vmul.f32 %v56, %v60
    %v63 = vlaneseq
    %v64 = vshrl.u32 %v63, 7
    %v65 = vsub.s32 0, %v64
    %v66 = vrot.slane %v28, %v65
    %v67 = vadd.f32 %v61, %v66
    %v68 = vadd.f32 %v62, %v66
    %v69 = vpack.c.bf16 %v68, %v67
    %v70 = vld [vmem:[%s1 + $0x2] sm:$0x1]
    %v71 = vld [vmem:[%s1 + $0x3] sm:$0x1]
    %v72 = vld [vmem:[%s1 + $0x4] sm:$0x1]
    %v73 = vld [vmem:[%s2] sm:$0xf]
    %v74 = vld [vmem:[%s2 + $0x4] sm:$0xf]
    %v75 = vld [vmem:[%s2 + $0x8] sm:$0xf]
    %v76 = vld [vmem:[%s2 + $0xc] sm:$0xf]
    %v77 = vlaneseq
    %v78 = vshrl.u32 %v77, 7
    %v79 = vsub.s32 0, %v78
    %v80 = vrot.slane %v70, %v79
    %v85 = vunpack.c.l.b16 %v73
    %v86 = vunpack.c.l.b16 %v74
    %v87 = vunpack.c.l.b16 %v75
    %v88 = vunpack.c.l.b16 %v76
    %v89 = vpack.c.b16 %v86, %v85
    %v90 = vpack.c.b16 %v88, %v87
    %v94 = vsel %vm29, %v69, 0
    %96 = vmatprep.subr.bf16.mxu0 0
    %97 = vmatpush1.bf16.msra.mxu0 %v89
    %98 = vmatprep.subr.bf16.mxu0 0
    %99 = vmatpush1.bf16.msra.mxu0 %v90
    %100 = vmatprep.subr.bf16.mxu0 0
    %101 = vmatpush1.bf16.msra.mxu0 0
    %102 = vmatprep.subr.bf16.mxu0 0
    %103 = vmatpush1.bf16.msra.mxu0 0
    %104 = vmatprep.subr.bf16.mxu0 0
    %105 = vmatpush1.bf16.msra.mxu0 0
    %106 = vmatprep.subr.bf16.mxu0 0
    %107 = vmatpush1.bf16.msra.mxu0 0
    %108 = vmatprep.subr.bf16.mxu0 0
    %109 = vmatpush1.bf16.msra.mxu0 0
    %110 = vmatprep.subr.bf16.mxu0 0
    %111 = vmatpush1.bf16.msra.mxu0 0
    %112 = vmatprep.subr.bf16.mxu0 0
    %113 = vmatpush1.bf16.msra.mxu0 0
    %114 = vmatprep.subr.bf16.mxu0 0
    %115 = vmatpush1.bf16.msra.mxu0 0
    %116 = vmatprep.subr.bf16.mxu0 0
    %117 = vmatpush1.bf16.msra.mxu0 0
    %118 = vmatprep.subr.bf16.mxu0 0
    %119 = vmatpush1.bf16.msra.mxu0 0
    %120 = vmatprep.subr.bf16.mxu0 0
    %121 = vmatpush1.bf16.msra.mxu0 0
    %122 = vmatprep.subr.bf16.mxu0 0
    %123 = vmatpush1.bf16.msra.mxu0 0
    %124 = vmatprep.subr.bf16.mxu0 0
    %125 = vmatpush1.bf16.msra.mxu0 0
    %126 = vmatprep.subr.bf16.mxu0 0
    %127 = vmatpush1.bf16.msra.mxu0 0
    %128 = vmatprep.mubr.bf16.mxu0 0
    %129 = vmatmul.mubr.bf16.gmra.mrb[0].mxu0 %v94
    %v130 = vpop.f32.mrb[0].mxu0
    %v131 = vadd.f32 %v80, %v130
    %v132 = vpop.f32.mrb[0].mxu0
    %v133 = vpop.f32.mrb[0].mxu0
    %v134 = vadd.f32 %v80, %v133
    %v135 = vpop.f32.mrb[0].mxu0
    %136 = vdwg.mxu0
    %s137 = scalar_lea.vmem %s2, 64
    %v138 = vld [vmem:[%s137] sm:$0xf]
    %v139 = vld [vmem:[%s137 + $0x4] sm:$0xf]
    %v140 = vld [vmem:[%s137 + $0x8] sm:$0xf]
    %v141 = vld [vmem:[%s137 + $0xc] sm:$0xf]
    %v142 = vlaneseq
    %v143 = vshrl.u32 %v142, 7
    %v144 = vsub.s32 0, %v143
    %v145 = vrot.slane %v71, %v144
    %v150 = vunpack.c.l.b16 %v138
    %v151 = vunpack.c.l.b16 %v139
    %v152 = vunpack.c.l.b16 %v140
    %v153 = vunpack.c.l.b16 %v141
    %v154 = vpack.c.b16 %v151, %v150
    %v155 = vpack.c.b16 %v153, %v152
    %158 = vmatprep.subr.bf16.mxu0 0
    %159 = vmatpush1.bf16.msra.mxu0 %v154
    %160 = vmatprep.subr.bf16.mxu0 0
    %161 = vmatpush1.bf16.msra.mxu0 %v155
    %162 = vmatprep.subr.bf16.mxu0 0
    %163 = vmatpush1.bf16.msra.mxu0 0
    %164 = vmatprep.subr.bf16.mxu0 0
    %165 = vmatpush1.bf16.msra.mxu0 0
    %166 = vmatprep.subr.bf16.mxu0 0
    %167 = vmatpush1.bf16.msra.mxu0 0
    %168 = vmatprep.subr.bf16.mxu0 0
    %169 = vmatpush1.bf16.msra.mxu0 0
    %170 = vmatprep.subr.bf16.mxu0 0
    %171 = vmatpush1.bf16.msra.mxu0 0
    %172 = vmatprep.subr.bf16.mxu0 0
    %173 = vmatpush1.bf16.msra.mxu0 0
    %174 = vmatprep.subr.bf16.mxu0 0
    %175 = vmatpush1.bf16.msra.mxu0 0
    %176 = vmatprep.subr.bf16.mxu0 0
    %177 = vmatpush1.bf16.msra.mxu0 0
    %178 = vmatprep.subr.bf16.mxu0 0
    %179 = vmatpush1.bf16.msra.mxu0 0
    %180 = vmatprep.subr.bf16.mxu0 0
    %181 = vmatpush1.bf16.msra.mxu0 0
    %182 = vmatprep.subr.bf16.mxu0 0
    %183 = vmatpush1.bf16.msra.mxu0 0
    %184 = vmatprep.subr.bf16.mxu0 0
    %185 = vmatpush1.bf16.msra.mxu0 0
    %186 = vmatprep.subr.bf16.mxu0 0
    %187 = vmatpush1.bf16.msra.mxu0 0
    %188 = vmatprep.subr.bf16.mxu0 0
    %189 = vmatpush1.bf16.msra.mxu0 0
    %190 = vmatprep.mubr.bf16.mxu0 0
    %191 = vmatmul.mubr.bf16.gmra.mrb[0].mxu0 %v94
    %v192 = vpop.f32.mrb[0].mxu0
    %v193 = vadd.f32 %v145, %v192
    %v194 = vpop.f32.mrb[0].mxu0
    %v195 = vpop.f32.mrb[0].mxu0
    %v196 = vadd.f32 %v145, %v195
    %v197 = vpop.f32.mrb[0].mxu0
    %198 = vdwg.mxu0
    %s199 = scalar_lea.vmem %s2, 128
    %v200 = vld [vmem:[%s199] sm:$0xf]
    %v201 = vld [vmem:[%s199 + $0x4] sm:$0xf]
    %v202 = vld [vmem:[%s199 + $0x8] sm:$0xf]
    %v203 = vld [vmem:[%s199 + $0xc] sm:$0xf]
    %v204 = vlaneseq
    %v205 = vshrl.u32 %v204, 7
    %v206 = vsub.s32 0, %v205
    %v207 = vrot.slane %v72, %v206
    %v212 = vunpack.c.l.b16 %v200
    %v213 = vunpack.c.l.b16 %v201
    %v214 = vunpack.c.l.b16 %v202
    %v215 = vunpack.c.l.b16 %v203
    %v216 = vpack.c.b16 %v213, %v212
    %v217 = vpack.c.b16 %v215, %v214
    %220 = vmatprep.subr.bf16.mxu0 0
    %221 = vmatpush1.bf16.msra.mxu0 %v216
    %222 = vmatprep.subr.bf16.mxu0 0
    %223 = vmatpush1.bf16.msra.mxu0 %v217
    %224 = vmatprep.subr.bf16.mxu0 0
    %225 = vmatpush1.bf16.msra.mxu0 0
    %226 = vmatprep.subr.bf16.mxu0 0
    %227 = vmatpush1.bf16.msra.mxu0 0
    %228 = vmatprep.subr.bf16.mxu0 0
    %229 = vmatpush1.bf16.msra.mxu0 0
    %230 = vmatprep.subr.bf16.mxu0 0
    %231 = vmatpush1.bf16.msra.mxu0 0
    %232 = vmatprep.subr.bf16.mxu0 0
    %233 = vmatpush1.bf16.msra.mxu0 0
    %234 = vmatprep.subr.bf16.mxu0 0
    %235 = vmatpush1.bf16.msra.mxu0 0
    %236 = vmatprep.subr.bf16.mxu0 0
    %237 = vmatpush1.bf16.msra.mxu0 0
    %238 = vmatprep.subr.bf16.mxu0 0
    %239 = vmatpush1.bf16.msra.mxu0 0
    %240 = vmatprep.subr.bf16.mxu0 0
    %241 = vmatpush1.bf16.msra.mxu0 0
    %242 = vmatprep.subr.bf16.mxu0 0
    %243 = vmatpush1.bf16.msra.mxu0 0
    %244 = vmatprep.subr.bf16.mxu0 0
    %245 = vmatpush1.bf16.msra.mxu0 0
    %246 = vmatprep.subr.bf16.mxu0 0
    %247 = vmatpush1.bf16.msra.mxu0 0
    %248 = vmatprep.subr.bf16.mxu0 0
    %249 = vmatpush1.bf16.msra.mxu0 0
    %250 = vmatprep.subr.bf16.mxu0 0
    %251 = vmatpush1.bf16.msra.mxu0 0
    %252 = vmatprep.mubr.bf16.mxu0 0
    %253 = vmatmul.mubr.bf16.gmra.mrb[0].mxu0 %v94
    %v254 = vpop.f32.mrb[0].mxu0
    %v255 = vadd.f32 %v207, %v254
    %v256 = vpop.f32.mrb[0].mxu0
    %v257 = vpop.f32.mrb[0].mxu0
    %v258 = vadd.f32 %v207, %v257
    %v259 = vpop.f32.mrb[0].mxu0
    %260 = vdwg.mxu0
    %v261 = vmul.f32 %v131, 0.35355338
    %v262 = vmul.f32 %v134, 0.35355338
    %v263 = vpack.c.bf16 %v261, %v261
    %v264 = vpack.c.bf16 %v262, %v262
    %v265 = vpack.c.bf16 %v193, %v193
    %v266 = vpack.c.bf16 %v196, %v196
    %vm267 = vcmask 64512
    %v269 = vsel %vm267, %v263, 0
    %v272 = vsel %vm267, %v265, 0
    %274 = vmatprep.subr.bf16.mxu0 0
    %275 = vmatpush1.bf16.xpose.msra.mxu0 %v272
    %276 = vmatprep.subr.bf16.mxu0 0
    %277 = vmatpush1.bf16.xpose.msra.mxu0 0
    %278 = vmatprep.subr.bf16.mxu0 0
    %279 = vmatpush1.bf16.xpose.msra.mxu0 0
    %280 = vmatprep.subr.bf16.mxu0 0
    %281 = vmatpush1.bf16.xpose.msra.mxu0 0
    %282 = vmatprep.subr.bf16.mxu0 0
    %283 = vmatpush1.bf16.xpose.msra.mxu0 0
    %284 = vmatprep.subr.bf16.mxu0 0
    %285 = vmatpush1.bf16.xpose.msra.mxu0 0
    %286 = vmatprep.subr.bf16.mxu0 0
    %287 = vmatpush1.bf16.xpose.msra.mxu0 0
    %288 = vmatprep.subr.bf16.mxu0 0
    %289 = vmatpush1.bf16.xpose.msra.mxu0 0
    %290 = vmatprep.subr.bf16.mxu0 0
    %291 = vmatpush1.bf16.xpose.msra.mxu0 0
    %292 = vmatprep.subr.bf16.mxu0 0
    %293 = vmatpush1.bf16.xpose.msra.mxu0 0
    %294 = vmatprep.subr.bf16.mxu0 0
    %295 = vmatpush1.bf16.xpose.msra.mxu0 0
    %296 = vmatprep.subr.bf16.mxu0 0
    %297 = vmatpush1.bf16.xpose.msra.mxu0 0
    %298 = vmatprep.subr.bf16.mxu0 0
    %299 = vmatpush1.bf16.xpose.msra.mxu0 0
    %300 = vmatprep.subr.bf16.mxu0 0
    %301 = vmatpush1.bf16.xpose.msra.mxu0 0
    %302 = vmatprep.subr.bf16.mxu0 0
    %303 = vmatpush1.bf16.xpose.msra.mxu0 0
    %304 = vmatprep.subr.bf16.mxu0 0
    %305 = vmatpush1.bf16.xpose.msra.mxu0 0
    %306 = vmatprep.mubr.bf16.mxu0 0
    %307 = vmatmul.mubr.bf16.gmra.mrb[0].mxu0 %v269
    %v308 = vpop.f32.mrb[0].mxu0
    %v309 = vadd.f32 0.0, %v308
    %v310 = vpop.f32.mrb[0].mxu0
    %v311 = vpop.f32.mrb[0].mxu0
    %v312 = vpop.f32.mrb[0].mxu0
    %313 = vdwg.mxu0
    %v315 = vsel %vm267, %v264, 0
    %v318 = vsel %vm267, %v266, 0
    %320 = vmatprep.subr.bf16.mxu0 0
    %321 = vmatpush1.bf16.xpose.msra.mxu0 %v318
    %322 = vmatprep.subr.bf16.mxu0 0
    %323 = vmatpush1.bf16.xpose.msra.mxu0 0
    %324 = vmatprep.subr.bf16.mxu0 0
    %325 = vmatpush1.bf16.xpose.msra.mxu0 0
    %326 = vmatprep.subr.bf16.mxu0 0
    %327 = vmatpush1.bf16.xpose.msra.mxu0 0
    %328 = vmatprep.subr.bf16.mxu0 0
    %329 = vmatpush1.bf16.xpose.msra.mxu0 0
    %330 = vmatprep.subr.bf16.mxu0 0
    %331 = vmatpush1.bf16.xpose.msra.mxu0 0
    %332 = vmatprep.subr.bf16.mxu0 0
    %333 = vmatpush1.bf16.xpose.msra.mxu0 0
    %334 = vmatprep.subr.bf16.mxu0 0
    %335 = vmatpush1.bf16.xpose.msra.mxu0 0
    %336 = vmatprep.subr.bf16.mxu0 0
    %337 = vmatpush1.bf16.xpose.msra.mxu0 0
    %338 = vmatprep.subr.bf16.mxu0 0
    %339 = vmatpush1.bf16.xpose.msra.mxu0 0
    %340 = vmatprep.subr.bf16.mxu0 0
    %341 = vmatpush1.bf16.xpose.msra.mxu0 0
    %342 = vmatprep.subr.bf16.mxu0 0
    %343 = vmatpush1.bf16.xpose.msra.mxu0 0
    %344 = vmatprep.subr.bf16.mxu0 0
    %345 = vmatpush1.bf16.xpose.msra.mxu0 0
    %346 = vmatprep.subr.bf16.mxu0 0
    %347 = vmatpush1.bf16.xpose.msra.mxu0 0
    %348 = vmatprep.subr.bf16.mxu0 0
    %349 = vmatpush1.bf16.xpose.msra.mxu0 0
    %350 = vmatprep.subr.bf16.mxu0 0
    %351 = vmatpush1.bf16.xpose.msra.mxu0 0
    %352 = vmatprep.mubr.bf16.mxu0 0
    %353 = vmatmul.mubr.bf16.gmra.mrb[0].mxu0 %v315
    %v354 = vpop.f32.mrb[0].mxu0
    %v355 = vadd.f32 0.0, %v354
    %v356 = vpop.f32.mrb[0].mxu0
    %v357 = vpop.f32.mrb[0].mxu0
    %v358 = vpop.f32.mrb[0].mxu0
    %359 = vdwg.mxu0
    %v360 = vsel %vm267, %v309, -inf
    %361 = vmax.xlane.f32.xlu0 %v360
    %v362 = vpop.xlane.xlu0 %361
    %v363 = vsel %vm267, %v355, -inf
    %364 = vmax.xlane.f32.xlu0 %v363
    %v365 = vpop.xlane.xlu0 %364
    %v366 = vsub.f32 %v309, %v362
    %v367 = vsub.f32 %v355, %v365
    %v368 = vmul.f32 %v366, 1.442695
    %v369 = vpow.pop %v368
    %v370 = vmul.f32 %v367, 1.442695
    %v371 = vpow.pop %v370
    %v372 = vsel %vm267, %v369, 0.0
    %373 = vadd.xlane.f32.xlu0 %v372
    %v374 = vpop.xlane.xlu0 %373
    %v375 = vsel %vm267, %v371, 0.0
    %376 = vadd.xlane.f32.xlu0 %v375
    %v377 = vpop.xlane.xlu0 %376
    %v378 = vrcp.pop %v374
    %v379 = vmul.f32 %v369, %v378
    %v380 = vrcp.pop %v377
    %v381 = vmul.f32 %v371, %v380
    %v382 = vpack.c.bf16 %v379, %v379
    %v383 = vpack.c.bf16 %v381, %v381
    %v384 = vpack.c.bf16 %v255, %v255
    %v385 = vpack.c.bf16 %v258, %v258
    %v387 = vsel %vm267, %v382, 0
    %vm389 = vcmask 1043456
    %v391 = vsel %vm389, %v384, 0
    %393 = vmatprep.subr.bf16.mxu0 0
    %394 = vmatpush1.bf16.msra.mxu0 %v391
    %395 = vmatprep.subr.bf16.mxu0 0
    %396 = vmatpush1.bf16.msra.mxu0 0
    %397 = vmatprep.subr.bf16.mxu0 0
    %398 = vmatpush1.bf16.msra.mxu0 0
    %399 = vmatprep.subr.bf16.mxu0 0
    %400 = vmatpush1.bf16.msra.mxu0 0
    %401 = vmatprep.subr.bf16.mxu0 0
    %402 = vmatpush1.bf16.msra.mxu0 0
    %403 = vmatprep.subr.bf16.mxu0 0
    %404 = vmatpush1.bf16.msra.mxu0 0
    %405 = vmatprep.subr.bf16.mxu0 0
    %406 = vmatpush1.bf16.msra.mxu0 0
    %407 = vmatprep.subr.bf16.mxu0 0
    %408 = vmatpush1.bf16.msra.mxu0 0
    %409 = vmatprep.subr.bf16.mxu0 0
    %410 = vmatpush1.bf16.msra.mxu0 0
    %411 = vmatprep.subr.bf16.mxu0 0
    %412 = vmatpush1.bf16.msra.mxu0 0
    %413 = vmatprep.subr.bf16.mxu0 0
    %414 = vmatpush1.bf16.msra.mxu0 0
    %415 = vmatprep.subr.bf16.mxu0 0
    %416 = vmatpush1.bf16.msra.mxu0 0
    %417 = vmatprep.subr.bf16.mxu0 0
    %418 = vmatpush1.bf16.msra.mxu0 0
    %419 = vmatprep.subr.bf16.mxu0 0
    %420 = vmatpush1.bf16.msra.mxu0 0
    %421 = vmatprep.subr.bf16.mxu0 0
    %422 = vmatpush1.bf16.msra.mxu0 0
    %423 = vmatprep.subr.bf16.mxu0 0
    %424 = vmatpush1.bf16.msra.mxu0 0
    %425 = vmatprep.mubr.bf16.mxu0 0
    %426 = vmatmul.mubr.bf16.gmra.mrb[0].mxu0 %v387
    %v427 = vpop.f32.mrb[0].mxu0
    %v428 = vadd.f32 0.0, %v427
    %v429 = vpop.f32.mrb[0].mxu0
    %v430 = vpop.f32.mrb[0].mxu0
    %v431 = vpop.f32.mrb[0].mxu0
    %432 = vdwg.mxu0
    %v434 = vsel %vm267, %v383, 0
    %v437 = vsel %vm389, %v385, 0
    %439 = vmatprep.subr.bf16.mxu0 0
    %440 = vmatpush1.bf16.msra.mxu0 %v437
    %441 = vmatprep.subr.bf16.mxu0 0
    %442 = vmatpush1.bf16.msra.mxu0 0
    %443 = vmatprep.subr.bf16.mxu0 0
    %444 = vmatpush1.bf16.msra.mxu0 0
    %445 = vmatprep.subr.bf16.mxu0 0
    %446 = vmatpush1.bf16.msra.mxu0 0
    %447 = vmatprep.subr.bf16.mxu0 0
    %448 = vmatpush1.bf16.msra.mxu0 0
    %449 = vmatprep.subr.bf16.mxu0 0
    %450 = vmatpush1.bf16.msra.mxu0 0
    %451 = vmatprep.subr.bf16.mxu0 0
    %452 = vmatpush1.bf16.msra.mxu0 0
    %453 = vmatprep.subr.bf16.mxu0 0
    %454 = vmatpush1.bf16.msra.mxu0 0
    %455 = vmatprep.subr.bf16.mxu0 0
    %456 = vmatpush1.bf16.msra.mxu0 0
    %457 = vmatprep.subr.bf16.mxu0 0
    %458 = vmatpush1.bf16.msra.mxu0 0
    %459 = vmatprep.subr.bf16.mxu0 0
    %460 = vmatpush1.bf16.msra.mxu0 0
    %461 = vmatprep.subr.bf16.mxu0 0
    %462 = vmatpush1.bf16.msra.mxu0 0
    %463 = vmatprep.subr.bf16.mxu0 0
    %464 = vmatpush1.bf16.msra.mxu0 0
    %465 = vmatprep.subr.bf16.mxu0 0
    %466 = vmatpush1.bf16.msra.mxu0 0
    %467 = vmatprep.subr.bf16.mxu0 0
    %468 = vmatpush1.bf16.msra.mxu0 0
    %469 = vmatprep.subr.bf16.mxu0 0
    %470 = vmatpush1.bf16.msra.mxu0 0
    %471 = vmatprep.mubr.bf16.mxu0 0
    %472 = vmatmul.mubr.bf16.gmra.mrb[0].mxu0 %v434
    %v473 = vpop.f32.mrb[0].mxu0
    %v474 = vadd.f32 0.0, %v473
    %v475 = vpop.f32.mrb[0].mxu0
    %v476 = vpop.f32.mrb[0].mxu0
    %v477 = vpop.f32.mrb[0].mxu0
    %478 = vdwg.mxu0
    %v479 = vpack.c.bf16 %v474, %v428
    %v480 = vld [vmem:[%s3] sm:$0xf]
    %v481 = vld [vmem:[%s1 + $0x2] sm:$0x1]
    %v482 = vld [vmem:[%s1 + $0x3] sm:$0x1]
    %v483 = vld [vmem:[%s1 + $0x4] sm:$0x1]
    %s484 = scalar_lea.vmem %s2, 16
    %v485 = vld [vmem:[%s484] sm:$0xf]
    %v486 = vld [vmem:[%s484 + $0x4] sm:$0xf]
    %v487 = vld [vmem:[%s484 + $0x8] sm:$0xf]
    %v488 = vld [vmem:[%s484 + $0xc] sm:$0xf]
    %v489 = vlaneseq
    %v490 = vshrl.u32 %v489, 7
    %v491 = vsub.s32 0, %v490
    %v492 = vrot.slane %v481, %v491
    %v497 = vunpack.c.l.b16 %v485
    %v498 = vunpack.c.l.b16 %v486
    %v499 = vunpack.c.l.b16 %v487
    %v500 = vunpack.c.l.b16 %v488
    %v501 = vpack.c.b16 %v498, %v497
    %v502 = vpack.c.b16 %v500, %v499
    %506 = vrot.lane.b32.xlu0 %v492, 120
    %v507 = vpop.permute.xlu0 %506
    %509 = vmatprep.subr.bf16.mxu0 0
    %510 = vmatpush1.bf16.msra.mxu0 %v501
    %511 = vmatprep.subr.bf16.mxu0 0
    %512 = vmatpush1.bf16.msra.mxu0 %v502
    %513 = vmatprep.subr.bf16.mxu0 0
    %514 = vmatpush1.bf16.msra.mxu0 0
    %515 = vmatprep.subr.bf16.mxu0 0
    %516 = vmatpush1.bf16.msra.mxu0 0
    %517 = vmatprep.subr.bf16.mxu0 0
    %518 = vmatpush1.bf16.msra.mxu0 0
    %519 = vmatprep.subr.bf16.mxu0 0
    %520 = vmatpush1.bf16.msra.mxu0 0
    %521 = vmatprep.subr.bf16.mxu0 0
    %522 = vmatpush1.bf16.msra.mxu0 0
    %523 = vmatprep.subr.bf16.mxu0 0
    %524 = vmatpush1.bf16.msra.mxu0 0
    %525 = vmatprep.subr.bf16.mxu0 0
    %526 = vmatpush1.bf16.msra.mxu0 0
    %527 = vmatprep.subr.bf16.mxu0 0
    %528 = vmatpush1.bf16.msra.mxu0 0
    %529 = vmatprep.subr.bf16.mxu0 0
    %530 = vmatpush1.bf16.msra.mxu0 0
    %531 = vmatprep.subr.bf16.mxu0 0
    %532 = vmatpush1.bf16.msra.mxu0 0
    %533 = vmatprep.subr.bf16.mxu0 0
    %534 = vmatpush1.bf16.msra.mxu0 0
    %535 = vmatprep.subr.bf16.mxu0 0
    %536 = vmatpush1.bf16.msra.mxu0 0
    %537 = vmatprep.subr.bf16.mxu0 0
    %538 = vmatpush1.bf16.msra.mxu0 0
    %539 = vmatprep.subr.bf16.mxu0 0
    %540 = vmatpush1.bf16.msra.mxu0 0
    %541 = vmatprep.mubr.bf16.mxu0 0
    %542 = vmatmul.mubr.bf16.gmra.mrb[0].mxu0 %v94
    %v543 = vpop.f32.mrb[0].mxu0
    %v544 = vadd.f32 %v507, %v543
    %v545 = vpop.f32.mrb[0].mxu0
    %v546 = vpop.f32.mrb[0].mxu0
    %v547 = vadd.f32 %v507, %v546
    %v548 = vpop.f32.mrb[0].mxu0
    %549 = vdwg.mxu0
    %s550 = scalar_lea.vmem %s2, 80
    %v551 = vld [vmem:[%s550] sm:$0xf]
    %v552 = vld [vmem:[%s550 + $0x4] sm:$0xf]
    %v553 = vld [vmem:[%s550 + $0x8] sm:$0xf]
    %v554 = vld [vmem:[%s550 + $0xc] sm:$0xf]
    %v555 = vlaneseq
    %v556 = vshrl.u32 %v555, 7
    %v557 = vsub.s32 0, %v556
    %v558 = vrot.slane %v482, %v557
    %v563 = vunpack.c.l.b16 %v551
    %v564 = vunpack.c.l.b16 %v552
    %v565 = vunpack.c.l.b16 %v553
    %v566 = vunpack.c.l.b16 %v554
    %v567 = vpack.c.b16 %v564, %v563
    %v568 = vpack.c.b16 %v566, %v565
    %572 = vrot.lane.b32.xlu0 %v558, 120
    %v573 = vpop.permute.xlu0 %572
    %575 = vmatprep.subr.bf16.mxu0 0
    %576 = vmatpush1.bf16.msra.mxu0 %v567
    %577 = vmatprep.subr.bf16.mxu0 0
    %578 = vmatpush1.bf16.msra.mxu0 %v568
    %579 = vmatprep.subr.bf16.mxu0 0
    %580 = vmatpush1.bf16.msra.mxu0 0
    %581 = vmatprep.subr.bf16.mxu0 0
    %582 = vmatpush1.bf16.msra.mxu0 0
    %583 = vmatprep.subr.bf16.mxu0 0
    %584 = vmatpush1.bf16.msra.mxu0 0
    %585 = vmatprep.subr.bf16.mxu0 0
    %586 = vmatpush1.bf16.msra.mxu0 0
    %587 = vmatprep.subr.bf16.mxu0 0
    %588 = vmatpush1.bf16.msra.mxu0 0
    %589 = vmatprep.subr.bf16.mxu0 0
    %590 = vmatpush1.bf16.msra.mxu0 0
    %591 = vmatprep.subr.bf16.mxu0 0
    %592 = vmatpush1.bf16.msra.mxu0 0
    %593 = vmatprep.subr.bf16.mxu0 0
    %594 = vmatpush1.bf16.msra.mxu0 0
    %595 = vmatprep.subr.bf16.mxu0 0
    %596 = vmatpush1.bf16.msra.mxu0 0
    %597 = vmatprep.subr.bf16.mxu0 0
    %598 = vmatpush1.bf16.msra.mxu0 0
    %599 = vmatprep.subr.bf16.mxu0 0
    %600 = vmatpush1.bf16.msra.mxu0 0
    %601 = vmatprep.subr.bf16.mxu0 0
    %602 = vmatpush1.bf16.msra.mxu0 0
    %603 = vmatprep.subr.bf16.mxu0 0
    %604 = vmatpush1.bf16.msra.mxu0 0
    %605 = vmatprep.subr.bf16.mxu0 0
    %606 = vmatpush1.bf16.msra.mxu0 0
    %607 = vmatprep.mubr.bf16.mxu0 0
    %608 = vmatmul.mubr.bf16.gmra.mrb[0].mxu0 %v94
    %v609 = vpop.f32.mrb[0].mxu0
    %v610 = vadd.f32 %v573, %v609
    %v611 = vpop.f32.mrb[0].mxu0
    %v612 = vpop.f32.mrb[0].mxu0
    %v613 = vadd.f32 %v573, %v612
    %v614 = vpop.f32.mrb[0].mxu0
    %615 = vdwg.mxu0
    %s616 = scalar_lea.vmem %s2, 144
    %v617 = vld [vmem:[%s616] sm:$0xf]
    %v618 = vld [vmem:[%s616 + $0x4] sm:$0xf]
    %v619 = vld [vmem:[%s616 + $0x8] sm:$0xf]
    %v620 = vld [vmem:[%s616 + $0xc] sm:$0xf]
    %v621 = vlaneseq
    %v622 = vshrl.u32 %v621, 7
    %v623 = vsub.s32 0, %v622
    %v624 = vrot.slane %v483, %v623
    %v629 = vunpack.c.l.b16 %v617
    %v630 = vunpack.c.l.b16 %v618
    %v631 = vunpack.c.l.b16 %v619
    %v632 = vunpack.c.l.b16 %v620
    %v633 = vpack.c.b16 %v630, %v629
    %v634 = vpack.c.b16 %v632, %v631
    %638 = vrot.lane.b32.xlu0 %v624, 120
    %v639 = vpop.permute.xlu0 %638
    %641 = vmatprep.subr.bf16.mxu0 0
    %642 = vmatpush1.bf16.msra.mxu0 %v633
    %643 = vmatprep.subr.bf16.mxu0 0
    %644 = vmatpush1.bf16.msra.mxu0 %v634
    %645 = vmatprep.subr.bf16.mxu0 0
    %646 = vmatpush1.bf16.msra.mxu0 0
    %647 = vmatprep.subr.bf16.mxu0 0
    %648 = vmatpush1.bf16.msra.mxu0 0
    %649 = vmatprep.subr.bf16.mxu0 0
    %650 = vmatpush1.bf16.msra.mxu0 0
    %651 = vmatprep.subr.bf16.mxu0 0
    %652 = vmatpush1.bf16.msra.mxu0 0
    %653 = vmatprep.subr.bf16.mxu0 0
    %654 = vmatpush1.bf16.msra.mxu0 0
    %655 = vmatprep.subr.bf16.mxu0 0
    %656 = vmatpush1.bf16.msra.mxu0 0
    %657 = vmatprep.subr.bf16.mxu0 0
    %658 = vmatpush1.bf16.msra.mxu0 0
    %659 = vmatprep.subr.bf16.mxu0 0
    %660 = vmatpush1.bf16.msra.mxu0 0
    %661 = vmatprep.subr.bf16.mxu0 0
    %662 = vmatpush1.bf16.msra.mxu0 0
    %663 = vmatprep.subr.bf16.mxu0 0
    %664 = vmatpush1.bf16.msra.mxu0 0
    %665 = vmatprep.subr.bf16.mxu0 0
    %666 = vmatpush1.bf16.msra.mxu0 0
    %667 = vmatprep.subr.bf16.mxu0 0
    %668 = vmatpush1.bf16.msra.mxu0 0
    %669 = vmatprep.subr.bf16.mxu0 0
    %670 = vmatpush1.bf16.msra.mxu0 0
    %671 = vmatprep.subr.bf16.mxu0 0
    %672 = vmatpush1.bf16.msra.mxu0 0
    %673 = vmatprep.mubr.bf16.mxu0 0
    %674 = vmatmul.mubr.bf16.gmra.mrb[0].mxu0 %v94
    %v675 = vpop.f32.mrb[0].mxu0
    %v676 = vadd.f32 %v639, %v675
    %v677 = vpop.f32.mrb[0].mxu0
    %v678 = vpop.f32.mrb[0].mxu0
    %v679 = vadd.f32 %v639, %v678
    %v680 = vpop.f32.mrb[0].mxu0
    %681 = vdwg.mxu0
    %v682 = vmul.f32 %v544, 0.35355338
    %v683 = vmul.f32 %v547, 0.35355338
    %v684 = vpack.c.bf16 %v682, %v682
    %v685 = vpack.c.bf16 %v683, %v683
    %v686 = vpack.c.bf16 %v610, %v610
    %v687 = vpack.c.bf16 %v613, %v613
    %v689 = vsel %vm267, %v684, 0
    %v692 = vsel %vm267, %v686, 0
    %694 = vmatprep.subr.bf16.mxu0 0
    %695 = vmatpush1.bf16.xpose.msra.mxu0 %v692
    %696 = vmatprep.subr.bf16.mxu0 0
    %697 = vmatpush1.bf16.xpose.msra.mxu0 0
    %698 = vmatprep.subr.bf16.mxu0 0
    %699 = vmatpush1.bf16.xpose.msra.mxu0 0
    %700 = vmatprep.subr.bf16.mxu0 0
    %701 = vmatpush1.bf16.xpose.msra.mxu0 0
    %702 = vmatprep.subr.bf16.mxu0 0
    %703 = vmatpush1.bf16.xpose.msra.mxu0 0
    %704 = vmatprep.subr.bf16.mxu0 0
    %705 = vmatpush1.bf16.xpose.msra.mxu0 0
    %706 = vmatprep.subr.bf16.mxu0 0
    %707 = vmatpush1.bf16.xpose.msra.mxu0 0
    %708 = vmatprep.subr.bf16.mxu0 0
    %709 = vmatpush1.bf16.xpose.msra.mxu0 0
    %710 = vmatprep.subr.bf16.mxu0 0
    %711 = vmatpush1.bf16.xpose.msra.mxu0 0
    %712 = vmatprep.subr.bf16.mxu0 0
    %713 = vmatpush1.bf16.xpose.msra.mxu0 0
    %714 = vmatprep.subr.bf16.mxu0 0
    %715 = vmatpush1.bf16.xpose.msra.mxu0 0
    %716 = vmatprep.subr.bf16.mxu0 0
    %717 = vmatpush1.bf16.xpose.msra.mxu0 0
    %718 = vmatprep.subr.bf16.mxu0 0
    %719 = vmatpush1.bf16.xpose.msra.mxu0 0
    %720 = vmatprep.subr.bf16.mxu0 0
    %721 = vmatpush1.bf16.xpose.msra.mxu0 0
    %722 = vmatprep.subr.bf16.mxu0 0
    %723 = vmatpush1.bf16.xpose.msra.mxu0 0
    %724 = vmatprep.subr.bf16.mxu0 0
    %725 = vmatpush1.bf16.xpose.msra.mxu0 0
    %726 = vmatprep.mubr.bf16.mxu0 0
    %727 = vmatmul.mubr.bf16.gmra.mrb[0].mxu0 %v689
    %v728 = vpop.f32.mrb[0].mxu0
    %v729 = vadd.f32 0.0, %v728
    %v730 = vpop.f32.mrb[0].mxu0
    %v731 = vpop.f32.mrb[0].mxu0
    %v732 = vpop.f32.mrb[0].mxu0
    %733 = vdwg.mxu0
    %v735 = vsel %vm267, %v685, 0
    %v738 = vsel %vm267, %v687, 0
    %740 = vmatprep.subr.bf16.mxu0 0
    %741 = vmatpush1.bf16.xpose.msra.mxu0 %v738
    %742 = vmatprep.subr.bf16.mxu0 0
    %743 = vmatpush1.bf16.xpose.msra.mxu0 0
    %744 = vmatprep.subr.bf16.mxu0 0
    %745 = vmatpush1.bf16.xpose.msra.mxu0 0
    %746 = vmatprep.subr.bf16.mxu0 0
    %747 = vmatpush1.bf16.xpose.msra.mxu0 0
    %748 = vmatprep.subr.bf16.mxu0 0
    %749 = vmatpush1.bf16.xpose.msra.mxu0 0
    %750 = vmatprep.subr.bf16.mxu0 0
    %751 = vmatpush1.bf16.xpose.msra.mxu0 0
    %752 = vmatprep.subr.bf16.mxu0 0
    %753 = vmatpush1.bf16.xpose.msra.mxu0 0
    %754 = vmatprep.subr.bf16.mxu0 0
    %755 = vmatpush1.bf16.xpose.msra.mxu0 0
    %756 = vmatprep.subr.bf16.mxu0 0
    %757 = vmatpush1.bf16.xpose.msra.mxu0 0
    %758 = vmatprep.subr.bf16.mxu0 0
    %759 = vmatpush1.bf16.xpose.msra.mxu0 0
    %760 = vmatprep.subr.bf16.mxu0 0
    %761 = vmatpush1.bf16.xpose.msra.mxu0 0
    %762 = vmatprep.subr.bf16.mxu0 0
    %763 = vmatpush1.bf16.xpose.msra.mxu0 0
    %764 = vmatprep.subr.bf16.mxu0 0
    %765 = vmatpush1.bf16.xpose.msra.mxu0 0
    %766 = vmatprep.subr.bf16.mxu0 0
    %767 = vmatpush1.bf16.xpose.msra.mxu0 0
    %768 = vmatprep.subr.bf16.mxu0 0
    %769 = vmatpush1.bf16.xpose.msra.mxu0 0
    %770 = vmatprep.subr.bf16.mxu0 0
    %771 = vmatpush1.bf16.xpose.msra.mxu0 0
    %772 = vmatprep.mubr.bf16.mxu0 0
    %773 = vmatmul.mubr.bf16.gmra.mrb[0].mxu0 %v735
    %v774 = vpop.f32.mrb[0].mxu0
    %v775 = vadd.f32 0.0, %v774
    %v776 = vpop.f32.mrb[0].mxu0
    %v777 = vpop.f32.mrb[0].mxu0
    %v778 = vpop.f32.mrb[0].mxu0
    %779 = vdwg.mxu0
    %v780 = vsel %vm267, %v729, -inf
    %781 = vmax.xlane.f32.xlu0 %v780
    %v782 = vpop.xlane.xlu0 %781
    %v783 = vsel %vm267, %v775, -inf
    %784 = vmax.xlane.f32.xlu0 %v783
    %v785 = vpop.xlane.xlu0 %784
    %v786 = vsub.f32 %v729, %v782
    %v787 = vsub.f32 %v775, %v785
    %v788 = vmul.f32 %v786, 1.442695
    %v789 = vpow.pop %v788
    %v790 = vmul.f32 %v787, 1.442695
    %v791 = vpow.pop %v790
    %v792 = vsel %vm267, %v789, 0.0
    %793 = vadd.xlane.f32.xlu0 %v792
    %v794 = vpop.xlane.xlu0 %793
    %v795 = vsel %vm267, %v791, 0.0
    %796 = vadd.xlane.f32.xlu0 %v795
    %v797 = vpop.xlane.xlu0 %796
    %v798 = vrcp.pop %v794
    %v799 = vmul.f32 %v789, %v798
    %v800 = vrcp.pop %v797
    %v801 = vmul.f32 %v791, %v800
    %v802 = vpack.c.bf16 %v799, %v799
    %v803 = vpack.c.bf16 %v801, %v801
    %v804 = vpack.c.bf16 %v676, %v676
    %v805 = vpack.c.bf16 %v679, %v679
    %v807 = vsel %vm267, %v802, 0
    %v810 = vsel %vm389, %v804, 0
    %812 = vmatprep.subr.bf16.mxu0 0
    %813 = vmatpush1.bf16.msra.mxu0 %v810
    %814 = vmatprep.subr.bf16.mxu0 0
    %815 = vmatpush1.bf16.msra.mxu0 0
    %816 = vmatprep.subr.bf16.mxu0 0
    %817 = vmatpush1.bf16.msra.mxu0 0
    %818 = vmatprep.subr.bf16.mxu0 0
    %819 = vmatpush1.bf16.msra.mxu0 0
    %820 = vmatprep.subr.bf16.mxu0 0
    %821 = vmatpush1.bf16.msra.mxu0 0
    %822 = vmatprep.subr.bf16.mxu0 0
    %823 = vmatpush1.bf16.msra.mxu0 0
    %824 = vmatprep.subr.bf16.mxu0 0
    %825 = vmatpush1.bf16.msra.mxu0 0
    %826 = vmatprep.subr.bf16.mxu0 0
    %827 = vmatpush1.bf16.msra.mxu0 0
    %828 = vmatprep.subr.bf16.mxu0 0
    %829 = vmatpush1.bf16.msra.mxu0 0
    %830 = vmatprep.subr.bf16.mxu0 0
    %831 = vmatpush1.bf16.msra.mxu0 0
    %832 = vmatprep.subr.bf16.mxu0 0
    %833 = vmatpush1.bf16.msra.mxu0 0
    %834 = vmatprep.subr.bf16.mxu0 0
    %835 = vmatpush1.bf16.msra.mxu0 0
    %836 = vmatprep.subr.bf16.mxu0 0
    %837 = vmatpush1.bf16.msra.mxu0 0
    %838 = vmatprep.subr.bf16.mxu0 0
    %839 = vmatpush1.bf16.msra.mxu0 0
    %840 = vmatprep.subr.bf16.mxu0 0
    %841 = vmatpush1.bf16.msra.mxu0 0
    %842 = vmatprep.subr.bf16.mxu0 0
    %843 = vmatpush1.bf16.msra.mxu0 0
    %844 = vmatprep.mubr.bf16.mxu0 0
    %845 = vmatmul.mubr.bf16.gmra.mrb[0].mxu0 %v807
    %v846 = vpop.f32.mrb[0].mxu0
    %v847 = vadd.f32 0.0, %v846
    %v848 = vpop.f32.mrb[0].mxu0
    %v849 = vpop.f32.mrb[0].mxu0
    %v850 = vpop.f32.mrb[0].mxu0
    %851 = vdwg.mxu0
    %v853 = vsel %vm267, %v803, 0
    %v856 = vsel %vm389, %v805, 0
    %858 = vmatprep.subr.bf16.mxu0 0
    %859 = vmatpush1.bf16.msra.mxu0 %v856
    %860 = vmatprep.subr.bf16.mxu0 0
    %861 = vmatpush1.bf16.msra.mxu0 0
    %862 = vmatprep.subr.bf16.mxu0 0
    %863 = vmatpush1.bf16.msra.mxu0 0
    %864 = vmatprep.subr.bf16.mxu0 0
    %865 = vmatpush1.bf16.msra.mxu0 0
    %866 = vmatprep.subr.bf16.mxu0 0
    %867 = vmatpush1.bf16.msra.mxu0 0
    %868 = vmatprep.subr.bf16.mxu0 0
    %869 = vmatpush1.bf16.msra.mxu0 0
    %870 = vmatprep.subr.bf16.mxu0 0
    %871 = vmatpush1.bf16.msra.mxu0 0
    %872 = vmatprep.subr.bf16.mxu0 0
    %873 = vmatpush1.bf16.msra.mxu0 0
    %874 = vmatprep.subr.bf16.mxu0 0
    %875 = vmatpush1.bf16.msra.mxu0 0
    %876 = vmatprep.subr.bf16.mxu0 0
    %877 = vmatpush1.bf16.msra.mxu0 0
    %878 = vmatprep.subr.bf16.mxu0 0
    %879 = vmatpush1.bf16.msra.mxu0 0
    %880 = vmatprep.subr.bf16.mxu0 0
    %881 = vmatpush1.bf16.msra.mxu0 0
    %882 = vmatprep.subr.bf16.mxu0 0
    %883 = vmatpush1.bf16.msra.mxu0 0
    %884 = vmatprep.subr.bf16.mxu0 0
    %885 = vmatpush1.bf16.msra.mxu0 0
    %886 = vmatprep.subr.bf16.mxu0 0
    %887 = vmatpush1.bf16.msra.mxu0 0
    %888 = vmatprep.subr.bf16.mxu0 0
    %889 = vmatpush1.bf16.msra.mxu0 0
    %890 = vmatprep.mubr.bf16.mxu0 0
    %891 = vmatmul.mubr.bf16.gmra.mrb[0].mxu0 %v853
    %v892 = vpop.f32.mrb[0].mxu0
    %v893 = vadd.f32 0.0, %v892
    %v894 = vpop.f32.mrb[0].mxu0
    %v895 = vpop.f32.mrb[0].mxu0
    %v896 = vpop.f32.mrb[0].mxu0
    %897 = vdwg.mxu0
    %v898 = vpack.c.bf16 %v893, %v847
    %s899 = scalar_lea.vmem %s3, 4
    %v900 = vld [vmem:[%s899] sm:$0xf]
    %v902 = vsel %vm267, %v898, 0
    %v905 = vsel %vm389, %v900, 0
    %907 = vmatprep.subr.bf16.mxu0 0
    %908 = vmatpush1.bf16.msra.mxu0 %v905
    %909 = vmatprep.subr.bf16.mxu0 0
    %910 = vmatpush1.bf16.msra.mxu0 0
    %911 = vmatprep.subr.bf16.mxu0 0
    %912 = vmatpush1.bf16.msra.mxu0 0
    %913 = vmatprep.subr.bf16.mxu0 0
    %914 = vmatpush1.bf16.msra.mxu0 0
    %915 = vmatprep.subr.bf16.mxu0 0
    %916 = vmatpush1.bf16.msra.mxu0 0
    %917 = vmatprep.subr.bf16.mxu0 0
    %918 = vmatpush1.bf16.msra.mxu0 0
    %919 = vmatprep.subr.bf16.mxu0 0
    %920 = vmatpush1.bf16.msra.mxu0 0
    %921 = vmatprep.subr.bf16.mxu0 0
    %922 = vmatpush1.bf16.msra.mxu0 0
    %923 = vmatprep.subr.bf16.mxu0 0
    %924 = vmatpush1.bf16.msra.mxu0 0
    %925 = vmatprep.subr.bf16.mxu0 0
    %926 = vmatpush1.bf16.msra.mxu0 0
    %927 = vmatprep.subr.bf16.mxu0 0
    %928 = vmatpush1.bf16.msra.mxu0 0
    %929 = vmatprep.subr.bf16.mxu0 0
    %930 = vmatpush1.bf16.msra.mxu0 0
    %931 = vmatprep.subr.bf16.mxu0 0
    %932 = vmatpush1.bf16.msra.mxu0 0
    %933 = vmatprep.subr.bf16.mxu0 0
    %934 = vmatpush1.bf16.msra.mxu0 0
    %935 = vmatprep.subr.bf16.mxu0 0
    %936 = vmatpush1.bf16.msra.mxu0 0
    %937 = vmatprep.subr.bf16.mxu0 0
    %938 = vmatpush1.bf16.msra.mxu0 0
    %939 = vmatprep.mubr.bf16.mxu0 0
    %940 = vmatmul.mubr.bf16.gmra.mrb[0].mxu0 %v902
    %v941 = vpop.f32.mrb[0].mxu0
    %v942 = vadd.f32 0.0, %v941
    %v943 = vpop.f32.mrb[0].mxu0
    %v944 = vpop.f32.mrb[0].mxu0
    %v945 = vadd.f32 0.0, %v944
    %v946 = vpop.f32.mrb[0].mxu0
    %947 = vdwg.mxu0
    %v949 = vsel %vm267, %v479, 0
    %v952 = vsel %vm389, %v480, 0
    %954 = vmatprep.subr.bf16.mxu0 0
    %955 = vmatpush1.bf16.msra.mxu0 %v952
    %956 = vmatprep.subr.bf16.mxu0 0
    %957 = vmatpush1.bf16.msra.mxu0 0
    %958 = vmatprep.subr.bf16.mxu0 0
    %959 = vmatpush1.bf16.msra.mxu0 0
    %960 = vmatprep.subr.bf16.mxu0 0
    %961 = vmatpush1.bf16.msra.mxu0 0
    %962 = vmatprep.subr.bf16.mxu0 0
    %963 = vmatpush1.bf16.msra.mxu0 0
    %964 = vmatprep.subr.bf16.mxu0 0
    %965 = vmatpush1.bf16.msra.mxu0 0
    %966 = vmatprep.subr.bf16.mxu0 0
    %967 = vmatpush1.bf16.msra.mxu0 0
    %968 = vmatprep.subr.bf16.mxu0 0
    %969 = vmatpush1.bf16.msra.mxu0 0
    %970 = vmatprep.subr.bf16.mxu0 0
    %971 = vmatpush1.bf16.msra.mxu0 0
    %972 = vmatprep.subr.bf16.mxu0 0
    %973 = vmatpush1.bf16.msra.mxu0 0
    %974 = vmatprep.subr.bf16.mxu0 0
    %975 = vmatpush1.bf16.msra.mxu0 0
    %976 = vmatprep.subr.bf16.mxu0 0
    %977 = vmatpush1.bf16.msra.mxu0 0
    %978 = vmatprep.subr.bf16.mxu0 0
    %979 = vmatpush1.bf16.msra.mxu0 0
    %980 = vmatprep.subr.bf16.mxu0 0
    %981 = vmatpush1.bf16.msra.mxu0 0
    %982 = vmatprep.subr.bf16.mxu0 0
    %983 = vmatpush1.bf16.msra.mxu0 0
    %984 = vmatprep.subr.bf16.mxu0 0
    %985 = vmatpush1.bf16.msra.mxu0 0
    %986 = vmatprep.mubr.bf16.mxu0 0
    %987 = vmatmul.mubr.bf16.gmra.mrb[0].mxu0 %v949
    %v988 = vpop.f32.mrb[0].mxu0
    %v989 = vadd.f32 %v942, %v988
    %v990 = vpop.f32.mrb[0].mxu0
    %v991 = vpop.f32.mrb[0].mxu0
    %v992 = vadd.f32 %v945, %v991
    %v993 = vpop.f32.mrb[0].mxu0
    %994 = vdwg.mxu0
    %v995 = vld [vmem:[%s1 + $0x2] sm:$0x1]
    %v996 = vld [vmem:[%s1 + $0x3] sm:$0x1]
    %v997 = vld [vmem:[%s1 + $0x4] sm:$0x1]
    %s998 = scalar_lea.vmem %s2, 32
    %v999 = vld [vmem:[%s998] sm:$0xf]
    %v1000 = vld [vmem:[%s998 + $0x4] sm:$0xf]
    %v1001 = vld [vmem:[%s998 + $0x8] sm:$0xf]
    %v1002 = vld [vmem:[%s998 + $0xc] sm:$0xf]
    %v1003 = vlaneseq
    %v1004 = vshrl.u32 %v1003, 7
    %v1005 = vsub.s32 0, %v1004
    %v1006 = vrot.slane %v995, %v1005
    %v1011 = vunpack.c.l.b16 %v999
    %v1012 = vunpack.c.l.b16 %v1000
    %v1013 = vunpack.c.l.b16 %v1001
    %v1014 = vunpack.c.l.b16 %v1002
    %v1015 = vpack.c.b16 %v1012, %v1011
    %v1016 = vpack.c.b16 %v1014, %v1013
    %1020 = vrot.lane.b32.xlu0 %v1006, 112
    %v1021 = vpop.permute.xlu0 %1020
    %1023 = vmatprep.subr.bf16.mxu0 0
    %1024 = vmatpush1.bf16.msra.mxu0 %v1015
    %1025 = vmatprep.subr.bf16.mxu0 0
    %1026 = vmatpush1.bf16.msra.mxu0 %v1016
    %1027 = vmatprep.subr.bf16.mxu0 0
    %1028 = vmatpush1.bf16.msra.mxu0 0
    %1029 = vmatprep.subr.bf16.mxu0 0
    %1030 = vmatpush1.bf16.msra.mxu0 0
    %1031 = vmatprep.subr.bf16.mxu0 0
    %1032 = vmatpush1.bf16.msra.mxu0 0
    %1033 = vmatprep.subr.bf16.mxu0 0
    %1034 = vmatpush1.bf16.msra.mxu0 0
    %1035 = vmatprep.subr.bf16.mxu0 0
    %1036 = vmatpush1.bf16.msra.mxu0 0
    %1037 = vmatprep.subr.bf16.mxu0 0
    %1038 = vmatpush1.bf16.msra.mxu0 0
    %1039 = vmatprep.subr.bf16.mxu0 0
    %1040 = vmatpush1.bf16.msra.mxu0 0
    %1041 = vmatprep.subr.bf16.mxu0 0
    %1042 = vmatpush1.bf16.msra.mxu0 0
    %1043 = vmatprep.subr.bf16.mxu0 0
    %1044 = vmatpush1.bf16.msra.mxu0 0
    %1045 = vmatprep.subr.bf16.mxu0 0
    %1046 = vmatpush1.bf16.msra.mxu0 0
    %1047 = vmatprep.subr.bf16.mxu0 0
    %1048 = vmatpush1.bf16.msra.mxu0 0
    %1049 = vmatprep.subr.bf16.mxu0 0
    %1050 = vmatpush1.bf16.msra.mxu0 0
    %1051 = vmatprep.subr.bf16.mxu0 0
    %1052 = vmatpush1.bf16.msra.mxu0 0
    %1053 = vmatprep.subr.bf16.mxu0 0
    %1054 = vmatpush1.bf16.msra.mxu0 0
    %1055 = vmatprep.mubr.bf16.mxu0 0
    %1056 = vmatmul.mubr.bf16.gmra.mrb[0].mxu0 %v94
    %v1057 = vpop.f32.mrb[0].mxu0
    %v1058 = vadd.f32 %v1021, %v1057
    %v1059 = vpop.f32.mrb[0].mxu0
    %v1060 = vpop.f32.mrb[0].mxu0
    %v1061 = vadd.f32 %v1021, %v1060
    %v1062 = vpop.f32.mrb[0].mxu0
    %1063 = vdwg.mxu0
    %s1064 = scalar_lea.vmem %s2, 96
    %v1065 = vld [vmem:[%s1064] sm:$0xf]
    %v1066 = vld [vmem:[%s1064 + $0x4] sm:$0xf]
    %v1067 = vld [vmem:[%s1064 + $0x8] sm:$0xf]
    %v1068 = vld [vmem:[%s1064 + $0xc] sm:$0xf]
    %v1069 = vlaneseq
    %v1070 = vshrl.u32 %v1069, 7
    %v1071 = vsub.s32 0, %v1070
    %v1072 = vrot.slane %v996, %v1071
    %v1077 = vunpack.c.l.b16 %v1065
    %v1078 = vunpack.c.l.b16 %v1066
    %v1079 = vunpack.c.l.b16 %v1067
    %v1080 = vunpack.c.l.b16 %v1068
    %v1081 = vpack.c.b16 %v1078, %v1077
    %v1082 = vpack.c.b16 %v1080, %v1079
    %1086 = vrot.lane.b32.xlu0 %v1072, 112
    %v1087 = vpop.permute.xlu0 %1086
    %1089 = vmatprep.subr.bf16.mxu0 0
    %1090 = vmatpush1.bf16.msra.mxu0 %v1081
    %1091 = vmatprep.subr.bf16.mxu0 0
    %1092 = vmatpush1.bf16.msra.mxu0 %v1082
    %1093 = vmatprep.subr.bf16.mxu0 0
    %1094 = vmatpush1.bf16.msra.mxu0 0
    %1095 = vmatprep.subr.bf16.mxu0 0
    %1096 = vmatpush1.bf16.msra.mxu0 0
    %1097 = vmatprep.subr.bf16.mxu0 0
    %1098 = vmatpush1.bf16.msra.mxu0 0
    %1099 = vmatprep.subr.bf16.mxu0 0
    %1100 = vmatpush1.bf16.msra.mxu0 0
    %1101 = vmatprep.subr.bf16.mxu0 0
    %1102 = vmatpush1.bf16.msra.mxu0 0
    %1103 = vmatprep.subr.bf16.mxu0 0
    %1104 = vmatpush1.bf16.msra.mxu0 0
    %1105 = vmatprep.subr.bf16.mxu0 0
    %1106 = vmatpush1.bf16.msra.mxu0 0
    %1107 = vmatprep.subr.bf16.mxu0 0
    %1108 = vmatpush1.bf16.msra.mxu0 0
    %1109 = vmatprep.subr.bf16.mxu0 0
    %1110 = vmatpush1.bf16.msra.mxu0 0
    %1111 = vmatprep.subr.bf16.mxu0 0
    %1112 = vmatpush1.bf16.msra.mxu0 0
    %1113 = vmatprep.subr.bf16.mxu0 0
    %1114 = vmatpush1.bf16.msra.mxu0 0
    %1115 = vmatprep.subr.bf16.mxu0 0
    %1116 = vmatpush1.bf16.msra.mxu0 0
    %1117 = vmatprep.subr.bf16.mxu0 0
    %1118 = vmatpush1.bf16.msra.mxu0 0
    %1119 = vmatprep.subr.bf16.mxu0 0
    %1120 = vmatpush1.bf16.msra.mxu0 0
    %1121 = vmatprep.mubr.bf16.mxu0 0
    %1122 = vmatmul.mubr.bf16.gmra.mrb[0].mxu0 %v94
    %v1123 = vpop.f32.mrb[0].mxu0
    %v1124 = vadd.f32 %v1087, %v1123
    %v1125 = vpop.f32.mrb[0].mxu0
    %v1126 = vpop.f32.mrb[0].mxu0
    %v1127 = vadd.f32 %v1087, %v1126
    %v1128 = vpop.f32.mrb[0].mxu0
    %1129 = vdwg.mxu0
    %s1130 = scalar_lea.vmem %s2, 160
    %v1131 = vld [vmem:[%s1130] sm:$0xf]
    %v1132 = vld [vmem:[%s1130 + $0x4] sm:$0xf]
    %v1133 = vld [vmem:[%s1130 + $0x8] sm:$0xf]
    %v1134 = vld [vmem:[%s1130 + $0xc] sm:$0xf]
    %v1135 = vlaneseq
    %v1136 = vshrl.u32 %v1135, 7
    %v1137 = vsub.s32 0, %v1136
    %v1138 = vrot.slane %v997, %v1137
    %v1143 = vunpack.c.l.b16 %v1131
    %v1144 = vunpack.c.l.b16 %v1132
    %v1145 = vunpack.c.l.b16 %v1133
    %v1146 = vunpack.c.l.b16 %v1134
    %v1147 = vpack.c.b16 %v1144, %v1143
    %v1148 = vpack.c.b16 %v1146, %v1145
    %1152 = vrot.lane.b32.xlu0 %v1138, 112
    %v1153 = vpop.permute.xlu0 %1152
    %1155 = vmatprep.subr.bf16.mxu0 0
    %1156 = vmatpush1.bf16.msra.mxu0 %v1147
    %1157 = vmatprep.subr.bf16.mxu0 0
    %1158 = vmatpush1.bf16.msra.mxu0 %v1148
    %1159 = vmatprep.subr.bf16.mxu0 0
    %1160 = vmatpush1.bf16.msra.mxu0 0
    %1161 = vmatprep.subr.bf16.mxu0 0
    %1162 = vmatpush1.bf16.msra.mxu0 0
    %1163 = vmatprep.subr.bf16.mxu0 0
    %1164 = vmatpush1.bf16.msra.mxu0 0
    %1165 = vmatprep.subr.bf16.mxu0 0
    %1166 = vmatpush1.bf16.msra.mxu0 0
    %1167 = vmatprep.subr.bf16.mxu0 0
    %1168 = vmatpush1.bf16.msra.mxu0 0
    %1169 = vmatprep.subr.bf16.mxu0 0
    %1170 = vmatpush1.bf16.msra.mxu0 0
    %1171 = vmatprep.subr.bf16.mxu0 0
    %1172 = vmatpush1.bf16.msra.mxu0 0
    %1173 = vmatprep.subr.bf16.mxu0 0
    %1174 = vmatpush1.bf16.msra.mxu0 0
    %1175 = vmatprep.subr.bf16.mxu0 0
    %1176 = vmatpush1.bf16.msra.mxu0 0
    %1177 = vmatprep.subr.bf16.mxu0 0
    %1178 = vmatpush1.bf16.msra.mxu0 0
    %1179 = vmatprep.subr.bf16.mxu0 0
    %1180 = vmatpush1.bf16.msra.mxu0 0
    %1181 = vmatprep.subr.bf16.mxu0 0
    %1182 = vmatpush1.bf16.msra.mxu0 0
    %1183 = vmatprep.subr.bf16.mxu0 0
    %1184 = vmatpush1.bf16.msra.mxu0 0
    %1185 = vmatprep.subr.bf16.mxu0 0
    %1186 = vmatpush1.bf16.msra.mxu0 0
    %1187 = vmatprep.mubr.bf16.mxu0 0
    %1188 = vmatmul.mubr.bf16.gmra.mrb[0].mxu0 %v94
    %v1189 = vpop.f32.mrb[0].mxu0
    %v1190 = vadd.f32 %v1153, %v1189
    %v1191 = vpop.f32.mrb[0].mxu0
    %v1192 = vpop.f32.mrb[0].mxu0
    %v1193 = vadd.f32 %v1153, %v1192
    %v1194 = vpop.f32.mrb[0].mxu0
    %1195 = vdwg.mxu0
    %v1196 = vmul.f32 %v1058, 0.35355338
    %v1197 = vmul.f32 %v1061, 0.35355338
    %v1198 = vpack.c.bf16 %v1196, %v1196
    %v1199 = vpack.c.bf16 %v1197, %v1197
    %v1200 = vpack.c.bf16 %v1124, %v1124
    %v1201 = vpack.c.bf16 %v1127, %v1127
    %v1203 = vsel %vm267, %v1198, 0
    %v1206 = vsel %vm267, %v1200, 0
    %1208 = vmatprep.subr.bf16.mxu0 0
    %1209 = vmatpush1.bf16.xpose.msra.mxu0 %v1206
    %1210 = vmatprep.subr.bf16.mxu0 0
    %1211 = vmatpush1.bf16.xpose.msra.mxu0 0
    %1212 = vmatprep.subr.bf16.mxu0 0
    %1213 = vmatpush1.bf16.xpose.msra.mxu0 0
    %1214 = vmatprep.subr.bf16.mxu0 0
    %1215 = vmatpush1.bf16.xpose.msra.mxu0 0
    %1216 = vmatprep.subr.bf16.mxu0 0
    %1217 = vmatpush1.bf16.xpose.msra.mxu0 0
    %1218 = vmatprep.subr.bf16.mxu0 0
    %1219 = vmatpush1.bf16.xpose.msra.mxu0 0
    %1220 = vmatprep.subr.bf16.mxu0 0
    %1221 = vmatpush1.bf16.xpose.msra.mxu0 0
    %1222 = vmatprep.subr.bf16.mxu0 0
    %1223 = vmatpush1.bf16.xpose.msra.mxu0 0
    %1224 = vmatprep.subr.bf16.mxu0 0
    %1225 = vmatpush1.bf16.xpose.msra.mxu0 0
    %1226 = vmatprep.subr.bf16.mxu0 0
    %1227 = vmatpush1.bf16.xpose.msra.mxu0 0
    %1228 = vmatprep.subr.bf16.mxu0 0
    %1229 = vmatpush1.bf16.xpose.msra.mxu0 0
    %1230 = vmatprep.subr.bf16.mxu0 0
    %1231 = vmatpush1.bf16.xpose.msra.mxu0 0
    %1232 = vmatprep.subr.bf16.mxu0 0
    %1233 = vmatpush1.bf16.xpose.msra.mxu0 0
    %1234 = vmatprep.subr.bf16.mxu0 0
    %1235 = vmatpush1.bf16.xpose.msra.mxu0 0
    %1236 = vmatprep.subr.bf16.mxu0 0
    %1237 = vmatpush1.bf16.xpose.msra.mxu0 0
    %1238 = vmatprep.subr.bf16.mxu0 0
    %1239 = vmatpush1.bf16.xpose.msra.mxu0 0
    %1240 = vmatprep.mubr.bf16.mxu0 0
    %1241 = vmatmul.mubr.bf16.gmra.mrb[0].mxu0 %v1203
    %v1242 = vpop.f32.mrb[0].mxu0
    %v1243 = vadd.f32 0.0, %v1242
    %v1244 = vpop.f32.mrb[0].mxu0
    %v1245 = vpop.f32.mrb[0].mxu0
    %v1246 = vpop.f32.mrb[0].mxu0
    %1247 = vdwg.mxu0
    %v1249 = vsel %vm267, %v1199, 0
    %v1252 = vsel %vm267, %v1201, 0
    %1254 = vmatprep.subr.bf16.mxu0 0
    %1255 = vmatpush1.bf16.xpose.msra.mxu0 %v1252
    %1256 = vmatprep.subr.bf16.mxu0 0
    %1257 = vmatpush1.bf16.xpose.msra.mxu0 0
    %1258 = vmatprep.subr.bf16.mxu0 0
    %1259 = vmatpush1.bf16.xpose.msra.mxu0 0
    %1260 = vmatprep.subr.bf16.mxu0 0
    %1261 = vmatpush1.bf16.xpose.msra.mxu0 0
    %1262 = vmatprep.subr.bf16.mxu0 0
    %1263 = vmatpush1.bf16.xpose.msra.mxu0 0
    %1264 = vmatprep.subr.bf16.mxu0 0
    %1265 = vmatpush1.bf16.xpose.msra.mxu0 0
    %1266 = vmatprep.subr.bf16.mxu0 0
    %1267 = vmatpush1.bf16.xpose.msra.mxu0 0
    %1268 = vmatprep.subr.bf16.mxu0 0
    %1269 = vmatpush1.bf16.xpose.msra.mxu0 0
    %1270 = vmatprep.subr.bf16.mxu0 0
    %1271 = vmatpush1.bf16.xpose.msra.mxu0 0
    %1272 = vmatprep.subr.bf16.mxu0 0
    %1273 = vmatpush1.bf16.xpose.msra.mxu0 0
    %1274 = vmatprep.subr.bf16.mxu0 0
    %1275 = vmatpush1.bf16.xpose.msra.mxu0 0
    %1276 = vmatprep.subr.bf16.mxu0 0
    %1277 = vmatpush1.bf16.xpose.msra.mxu0 0
    %1278 = vmatprep.subr.bf16.mxu0 0
    %1279 = vmatpush1.bf16.xpose.msra.mxu0 0
    %1280 = vmatprep.subr.bf16.mxu0 0
    %1281 = vmatpush1.bf16.xpose.msra.mxu0 0
    %1282 = vmatprep.subr.bf16.mxu0 0
    %1283 = vmatpush1.bf16.xpose.msra.mxu0 0
    %1284 = vmatprep.subr.bf16.mxu0 0
    %1285 = vmatpush1.bf16.xpose.msra.mxu0 0
    %1286 = vmatprep.mubr.bf16.mxu0 0
    %1287 = vmatmul.mubr.bf16.gmra.mrb[0].mxu0 %v1249
    %v1288 = vpop.f32.mrb[0].mxu0
    %v1289 = vadd.f32 0.0, %v1288
    %v1290 = vpop.f32.mrb[0].mxu0
    %v1291 = vpop.f32.mrb[0].mxu0
    %v1292 = vpop.f32.mrb[0].mxu0
    %1293 = vdwg.mxu0
    %v1294 = vsel %vm267, %v1243, -inf
    %1295 = vmax.xlane.f32.xlu0 %v1294
    %v1296 = vpop.xlane.xlu0 %1295
    %v1297 = vsel %vm267, %v1289, -inf
    %1298 = vmax.xlane.f32.xlu0 %v1297
    %v1299 = vpop.xlane.xlu0 %1298
    %v1300 = vsub.f32 %v1243, %v1296
    %v1301 = vsub.f32 %v1289, %v1299
    %v1302 = vmul.f32 %v1300, 1.442695
    %v1303 = vpow.pop %v1302
    %v1304 = vmul.f32 %v1301, 1.442695
    %v1305 = vpow.pop %v1304
    %v1306 = vsel %vm267, %v1303, 0.0
    %1307 = vadd.xlane.f32.xlu0 %v1306
    %v1308 = vpop.xlane.xlu0 %1307
    %v1309 = vsel %vm267, %v1305, 0.0
    %1310 = vadd.xlane.f32.xlu0 %v1309
    %v1311 = vpop.xlane.xlu0 %1310
    %v1312 = vrcp.pop %v1308
    %v1313 = vmul.f32 %v1303, %v1312
    %v1314 = vrcp.pop %v1311
    %v1315 = vmul.f32 %v1305, %v1314
    %v1316 = vpack.c.bf16 %v1313, %v1313
    %v1317 = vpack.c.bf16 %v1315, %v1315
    %v1318 = vpack.c.bf16 %v1190, %v1190
    %v1319 = vpack.c.bf16 %v1193, %v1193
    %v1321 = vsel %vm267, %v1316, 0
    %v1324 = vsel %vm389, %v1318, 0
    %1326 = vmatprep.subr.bf16.mxu0 0
    %1327 = vmatpush1.bf16.msra.mxu0 %v1324
    %1328 = vmatprep.subr.bf16.mxu0 0
    %1329 = vmatpush1.bf16.msra.mxu0 0
    %1330 = vmatprep.subr.bf16.mxu0 0
    %1331 = vmatpush1.bf16.msra.mxu0 0
    %1332 = vmatprep.subr.bf16.mxu0 0
    %1333 = vmatpush1.bf16.msra.mxu0 0
    %1334 = vmatprep.subr.bf16.mxu0 0
    %1335 = vmatpush1.bf16.msra.mxu0 0
    %1336 = vmatprep.subr.bf16.mxu0 0
    %1337 = vmatpush1.bf16.msra.mxu0 0
    %1338 = vmatprep.subr.bf16.mxu0 0
    %1339 = vmatpush1.bf16.msra.mxu0 0
    %1340 = vmatprep.subr.bf16.mxu0 0
    %1341 = vmatpush1.bf16.msra.mxu0 0
    %1342 = vmatprep.subr.bf16.mxu0 0
    %1343 = vmatpush1.bf16.msra.mxu0 0
    %1344 = vmatprep.subr.bf16.mxu0 0
    %1345 = vmatpush1.bf16.msra.mxu0 0
    %1346 = vmatprep.subr.bf16.mxu0 0
    %1347 = vmatpush1.bf16.msra.mxu0 0
    %1348 = vmatprep.subr.bf16.mxu0 0
    %1349 = vmatpush1.bf16.msra.mxu0 0
    %1350 = vmatprep.subr.bf16.mxu0 0
    %1351 = vmatpush1.bf16.msra.mxu0 0
    %1352 = vmatprep.subr.bf16.mxu0 0
    %1353 = vmatpush1.bf16.msra.mxu0 0
    %1354 = vmatprep.subr.bf16.mxu0 0
    %1355 = vmatpush1.bf16.msra.mxu0 0
    %1356 = vmatprep.subr.bf16.mxu0 0
    %1357 = vmatpush1.bf16.msra.mxu0 0
    %1358 = vmatprep.mubr.bf16.mxu0 0
    %1359 = vmatmul.mubr.bf16.gmra.mrb[0].mxu0 %v1321
    %v1360 = vpop.f32.mrb[0].mxu0
    %v1361 = vadd.f32 0.0, %v1360
    %v1362 = vpop.f32.mrb[0].mxu0
    %v1363 = vpop.f32.mrb[0].mxu0
    %v1364 = vpop.f32.mrb[0].mxu0
    %1365 = vdwg.mxu0
    %v1367 = vsel %vm267, %v1317, 0
    %v1370 = vsel %vm389, %v1319, 0
    %1372 = vmatprep.subr.bf16.mxu0 0
    %1373 = vmatpush1.bf16.msra.mxu0 %v1370
    %1374 = vmatprep.subr.bf16.mxu0 0
    %1375 = vmatpush1.bf16.msra.mxu0 0
    %1376 = vmatprep.subr.bf16.mxu0 0
    %1377 = vmatpush1.bf16.msra.mxu0 0
    %1378 = vmatprep.subr.bf16.mxu0 0
    %1379 = vmatpush1.bf16.msra.mxu0 0
    %1380 = vmatprep.subr.bf16.mxu0 0
    %1381 = vmatpush1.bf16.msra.mxu0 0
    %1382 = vmatprep.subr.bf16.mxu0 0
    %1383 = vmatpush1.bf16.msra.mxu0 0
    %1384 = vmatprep.subr.bf16.mxu0 0
    %1385 = vmatpush1.bf16.msra.mxu0 0
    %1386 = vmatprep.subr.bf16.mxu0 0
    %1387 = vmatpush1.bf16.msra.mxu0 0
    %1388 = vmatprep.subr.bf16.mxu0 0
    %1389 = vmatpush1.bf16.msra.mxu0 0
    %1390 = vmatprep.subr.bf16.mxu0 0
    %1391 = vmatpush1.bf16.msra.mxu0 0
    %1392 = vmatprep.subr.bf16.mxu0 0
    %1393 = vmatpush1.bf16.msra.mxu0 0
    %1394 = vmatprep.subr.bf16.mxu0 0
    %1395 = vmatpush1.bf16.msra.mxu0 0
    %1396 = vmatprep.subr.bf16.mxu0 0
    %1397 = vmatpush1.bf16.msra.mxu0 0
    %1398 = vmatprep.subr.bf16.mxu0 0
    %1399 = vmatpush1.bf16.msra.mxu0 0
    %1400 = vmatprep.subr.bf16.mxu0 0
    %1401 = vmatpush1.bf16.msra.mxu0 0
    %1402 = vmatprep.subr.bf16.mxu0 0
    %1403 = vmatpush1.bf16.msra.mxu0 0
    %1404 = vmatprep.mubr.bf16.mxu0 0
    %1405 = vmatmul.mubr.bf16.gmra.mrb[0].mxu0 %v1367
    %v1406 = vpop.f32.mrb[0].mxu0
    %v1407 = vadd.f32 0.0, %v1406
    %v1408 = vpop.f32.mrb[0].mxu0
    %v1409 = vpop.f32.mrb[0].mxu0
    %v1410 = vpop.f32.mrb[0].mxu0
    %1411 = vdwg.mxu0
    %v1412 = vpack.c.bf16 %v1407, %v1361
    %s1413 = scalar_lea.vmem %s3, 8
    %v1414 = vld [vmem:[%s1413] sm:$0xf]
    %v1416 = vsel %vm267, %v1412, 0
    %v1419 = vsel %vm389, %v1414, 0
    %1421 = vmatprep.subr.bf16.mxu0 0
    %1422 = vmatpush1.bf16.msra.mxu0 %v1419
    %1423 = vmatprep.subr.bf16.mxu0 0
    %1424 = vmatpush1.bf16.msra.mxu0 0
    %1425 = vmatprep.subr.bf16.mxu0 0
    %1426 = vmatpush1.bf16.msra.mxu0 0
    %1427 = vmatprep.subr.bf16.mxu0 0
    %1428 = vmatpush1.bf16.msra.mxu0 0
    %1429 = vmatprep.subr.bf16.mxu0 0
    %1430 = vmatpush1.bf16.msra.mxu0 0
    %1431 = vmatprep.subr.bf16.mxu0 0
    %1432 = vmatpush1.bf16.msra.mxu0 0
    %1433 = vmatprep.subr.bf16.mxu0 0
    %1434 = vmatpush1.bf16.msra.mxu0 0
    %1435 = vmatprep.subr.bf16.mxu0 0
    %1436 = vmatpush1.bf16.msra.mxu0 0
    %1437 = vmatprep.subr.bf16.mxu0 0
    %1438 = vmatpush1.bf16.msra.mxu0 0
    %1439 = vmatprep.subr.bf16.mxu0 0
    %1440 = vmatpush1.bf16.msra.mxu0 0
    %1441 = vmatprep.subr.bf16.mxu0 0
    %1442 = vmatpush1.bf16.msra.mxu0 0
    %1443 = vmatprep.subr.bf16.mxu0 0
    %1444 = vmatpush1.bf16.msra.mxu0 0
    %1445 = vmatprep.subr.bf16.mxu0 0
    %1446 = vmatpush1.bf16.msra.mxu0 0
    %1447 = vmatprep.subr.bf16.mxu0 0
    %1448 = vmatpush1.bf16.msra.mxu0 0
    %1449 = vmatprep.subr.bf16.mxu0 0
    %1450 = vmatpush1.bf16.msra.mxu0 0
    %1451 = vmatprep.subr.bf16.mxu0 0
    %1452 = vmatpush1.bf16.msra.mxu0 0
    %1453 = vmatprep.mubr.bf16.mxu0 0
    %1454 = vmatmul.mubr.bf16.gmra.mrb[0].mxu0 %v1416
    %v1455 = vpop.f32.mrb[0].mxu0
    %v1456 = vadd.f32 0.0, %v1455
    %v1457 = vpop.f32.mrb[0].mxu0
    %v1458 = vpop.f32.mrb[0].mxu0
    %v1459 = vadd.f32 0.0, %v1458
    %v1460 = vpop.f32.mrb[0].mxu0
    %1461 = vdwg.mxu0
    %v1462 = vadd.f32 %v989, %v1456
    %v1463 = vadd.f32 %v992, %v1459
    %v1464 = vld [vmem:[%s1 + $0x2] sm:$0x1]
    %v1465 = vld [vmem:[%s1 + $0x3] sm:$0x1]
    %v1466 = vld [vmem:[%s1 + $0x4] sm:$0x1]
    %s1467 = scalar_lea.vmem %s2, 48
    %v1468 = vld [vmem:[%s1467] sm:$0xf]
    %v1469 = vld [vmem:[%s1467 + $0x4] sm:$0xf]
    %v1470 = vld [vmem:[%s1467 + $0x8] sm:$0xf]
    %v1471 = vld [vmem:[%s1467 + $0xc] sm:$0xf]
    %v1472 = vlaneseq
    %v1473 = vshrl.u32 %v1472, 7
    %v1474 = vsub.s32 0, %v1473
    %v1475 = vrot.slane %v1464, %v1474
    %v1480 = vunpack.c.l.b16 %v1468
    %v1481 = vunpack.c.l.b16 %v1469
    %v1482 = vunpack.c.l.b16 %v1470
    %v1483 = vunpack.c.l.b16 %v1471
    %v1484 = vpack.c.b16 %v1481, %v1480
    %v1485 = vpack.c.b16 %v1483, %v1482
    %1489 = vrot.lane.b32.xlu0 %v1475, 104
    %v1490 = vpop.permute.xlu0 %1489
    %1492 = vmatprep.subr.bf16.mxu0 0
    %1493 = vmatpush1.bf16.msra.mxu0 %v1484
    %1494 = vmatprep.subr.bf16.mxu0 0
    %1495 = vmatpush1.bf16.msra.mxu0 %v1485
    %1496 = vmatprep.subr.bf16.mxu0 0
    %1497 = vmatpush1.bf16.msra.mxu0 0
    %1498 = vmatprep.subr.bf16.mxu0 0
    %1499 = vmatpush1.bf16.msra.mxu0 0
    %1500 = vmatprep.subr.bf16.mxu0 0
    %1501 = vmatpush1.bf16.msra.mxu0 0
    %1502 = vmatprep.subr.bf16.mxu0 0
    %1503 = vmatpush1.bf16.msra.mxu0 0
    %1504 = vmatprep.subr.bf16.mxu0 0
    %1505 = vmatpush1.bf16.msra.mxu0 0
    %1506 = vmatprep.subr.bf16.mxu0 0
    %1507 = vmatpush1.bf16.msra.mxu0 0
    %1508 = vmatprep.subr.bf16.mxu0 0
    %1509 = vmatpush1.bf16.msra.mxu0 0
    %1510 = vmatprep.subr.bf16.mxu0 0
    %1511 = vmatpush1.bf16.msra.mxu0 0
    %1512 = vmatprep.subr.bf16.mxu0 0
    %1513 = vmatpush1.bf16.msra.mxu0 0
    %1514 = vmatprep.subr.bf16.mxu0 0
    %1515 = vmatpush1.bf16.msra.mxu0 0
    %1516 = vmatprep.subr.bf16.mxu0 0
    %1517 = vmatpush1.bf16.msra.mxu0 0
    %1518 = vmatprep.subr.bf16.mxu0 0
    %1519 = vmatpush1.bf16.msra.mxu0 0
    %1520 = vmatprep.subr.bf16.mxu0 0
    %1521 = vmatpush1.bf16.msra.mxu0 0
    %1522 = vmatprep.subr.bf16.mxu0 0
    %1523 = vmatpush1.bf16.msra.mxu0 0
    %1524 = vmatprep.mubr.bf16.mxu0 0
    %1525 = vmatmul.mubr.bf16.gmra.mrb[0].mxu0 %v94
    %v1526 = vpop.f32.mrb[0].mxu0
    %v1527 = vadd.f32 %v1490, %v1526
    %v1528 = vpop.f32.mrb[0].mxu0
    %v1529 = vpop.f32.mrb[0].mxu0
    %v1530 = vadd.f32 %v1490, %v1529
    %v1531 = vpop.f32.mrb[0].mxu0
    %1532 = vdwg.mxu0
    %s1533 = scalar_lea.vmem %s2, 112
    %v1534 = vld [vmem:[%s1533] sm:$0xf]
    %v1535 = vld [vmem:[%s1533 + $0x4] sm:$0xf]
    %v1536 = vld [vmem:[%s1533 + $0x8] sm:$0xf]
    %v1537 = vld [vmem:[%s1533 + $0xc] sm:$0xf]
    %v1538 = vlaneseq
    %v1539 = vshrl.u32 %v1538, 7
    %v1540 = vsub.s32 0, %v1539
    %v1541 = vrot.slane %v1465, %v1540
    %v1546 = vunpack.c.l.b16 %v1534
    %v1547 = vunpack.c.l.b16 %v1535
    %v1548 = vunpack.c.l.b16 %v1536
    %v1549 = vunpack.c.l.b16 %v1537
    %v1550 = vpack.c.b16 %v1547, %v1546
    %v1551 = vpack.c.b16 %v1549, %v1548
    %1555 = vrot.lane.b32.xlu0 %v1541, 104
    %v1556 = vpop.permute.xlu0 %1555
    %1558 = vmatprep.subr.bf16.mxu0 0
    %1559 = vmatpush1.bf16.msra.mxu0 %v1550
    %1560 = vmatprep.subr.bf16.mxu0 0
    %1561 = vmatpush1.bf16.msra.mxu0 %v1551
    %1562 = vmatprep.subr.bf16.mxu0 0
    %1563 = vmatpush1.bf16.msra.mxu0 0
    %1564 = vmatprep.subr.bf16.mxu0 0
    %1565 = vmatpush1.bf16.msra.mxu0 0
    %1566 = vmatprep.subr.bf16.mxu0 0
    %1567 = vmatpush1.bf16.msra.mxu0 0
    %1568 = vmatprep.subr.bf16.mxu0 0
    %1569 = vmatpush1.bf16.msra.mxu0 0
    %1570 = vmatprep.subr.bf16.mxu0 0
    %1571 = vmatpush1.bf16.msra.mxu0 0
    %1572 = vmatprep.subr.bf16.mxu0 0
    %1573 = vmatpush1.bf16.msra.mxu0 0
    %1574 = vmatprep.subr.bf16.mxu0 0
    %1575 = vmatpush1.bf16.msra.mxu0 0
    %1576 = vmatprep.subr.bf16.mxu0 0
    %1577 = vmatpush1.bf16.msra.mxu0 0
    %1578 = vmatprep.subr.bf16.mxu0 0
    %1579 = vmatpush1.bf16.msra.mxu0 0
    %1580 = vmatprep.subr.bf16.mxu0 0
    %1581 = vmatpush1.bf16.msra.mxu0 0
    %1582 = vmatprep.subr.bf16.mxu0 0
    %1583 = vmatpush1.bf16.msra.mxu0 0
    %1584 = vmatprep.subr.bf16.mxu0 0
    %1585 = vmatpush1.bf16.msra.mxu0 0
    %1586 = vmatprep.subr.bf16.mxu0 0
    %1587 = vmatpush1.bf16.msra.mxu0 0
    %1588 = vmatprep.subr.bf16.mxu0 0
    %1589 = vmatpush1.bf16.msra.mxu0 0
    %1590 = vmatprep.mubr.bf16.mxu0 0
    %1591 = vmatmul.mubr.bf16.gmra.mrb[0].mxu0 %v94
    %v1592 = vpop.f32.mrb[0].mxu0
    %v1593 = vadd.f32 %v1556, %v1592
    %v1594 = vpop.f32.mrb[0].mxu0
    %v1595 = vpop.f32.mrb[0].mxu0
    %v1596 = vadd.f32 %v1556, %v1595
    %v1597 = vpop.f32.mrb[0].mxu0
    %1598 = vdwg.mxu0
    %s1599 = scalar_lea.vmem %s2, 176
    %v1600 = vld [vmem:[%s1599] sm:$0xf]
    %v1601 = vld [vmem:[%s1599 + $0x4] sm:$0xf]
    %v1602 = vld [vmem:[%s1599 + $0x8] sm:$0xf]
    %v1603 = vld [vmem:[%s1599 + $0xc] sm:$0xf]
    %v1604 = vlaneseq
    %v1605 = vshrl.u32 %v1604, 7
    %v1606 = vsub.s32 0, %v1605
    %v1607 = vrot.slane %v1466, %v1606
    %v1612 = vunpack.c.l.b16 %v1600
    %v1613 = vunpack.c.l.b16 %v1601
    %v1614 = vunpack.c.l.b16 %v1602
    %v1615 = vunpack.c.l.b16 %v1603
    %v1616 = vpack.c.b16 %v1613, %v1612
    %v1617 = vpack.c.b16 %v1615, %v1614
    %1621 = vrot.lane.b32.xlu0 %v1607, 104
    %v1622 = vpop.permute.xlu0 %1621
    %1624 = vmatprep.subr.bf16.mxu0 0
    %1625 = vmatpush1.bf16.msra.mxu0 %v1616
    %1626 = vmatprep.subr.bf16.mxu0 0
    %1627 = vmatpush1.bf16.msra.mxu0 %v1617
    %1628 = vmatprep.subr.bf16.mxu0 0
    %1629 = vmatpush1.bf16.msra.mxu0 0
    %1630 = vmatprep.subr.bf16.mxu0 0
    %1631 = vmatpush1.bf16.msra.mxu0 0
    %1632 = vmatprep.subr.bf16.mxu0 0
    %1633 = vmatpush1.bf16.msra.mxu0 0
    %1634 = vmatprep.subr.bf16.mxu0 0
    %1635 = vmatpush1.bf16.msra.mxu0 0
    %1636 = vmatprep.subr.bf16.mxu0 0
    %1637 = vmatpush1.bf16.msra.mxu0 0
    %1638 = vmatprep.subr.bf16.mxu0 0
    %1639 = vmatpush1.bf16.msra.mxu0 0
    %1640 = vmatprep.subr.bf16.mxu0 0
    %1641 = vmatpush1.bf16.msra.mxu0 0
    %1642 = vmatprep.subr.bf16.mxu0 0
    %1643 = vmatpush1.bf16.msra.mxu0 0
    %1644 = vmatprep.subr.bf16.mxu0 0
    %1645 = vmatpush1.bf16.msra.mxu0 0
    %1646 = vmatprep.subr.bf16.mxu0 0
    %1647 = vmatpush1.bf16.msra.mxu0 0
    %1648 = vmatprep.subr.bf16.mxu0 0
    %1649 = vmatpush1.bf16.msra.mxu0 0
    %1650 = vmatprep.subr.bf16.mxu0 0
    %1651 = vmatpush1.bf16.msra.mxu0 0
    %1652 = vmatprep.subr.bf16.mxu0 0
    %1653 = vmatpush1.bf16.msra.mxu0 0
    %1654 = vmatprep.subr.bf16.mxu0 0
    %1655 = vmatpush1.bf16.msra.mxu0 0
    %1656 = vmatprep.mubr.bf16.mxu0 0
    %1657 = vmatmul.mubr.bf16.gmra.mrb[0].mxu0 %v94
    %v1658 = vpop.f32.mrb[0].mxu0
    %v1659 = vadd.f32 %v1622, %v1658
    %v1660 = vpop.f32.mrb[0].mxu0
    %v1661 = vpop.f32.mrb[0].mxu0
    %v1662 = vadd.f32 %v1622, %v1661
    %v1663 = vpop.f32.mrb[0].mxu0
    %1664 = vdwg.mxu0
    %v1665 = vmul.f32 %v1527, 0.35355338
    %v1666 = vmul.f32 %v1530, 0.35355338
    %v1667 = vpack.c.bf16 %v1665, %v1665
    %v1668 = vpack.c.bf16 %v1666, %v1666
    %v1669 = vpack.c.bf16 %v1593, %v1593
    %v1670 = vpack.c.bf16 %v1596, %v1596
    %v1672 = vsel %vm267, %v1667, 0
    %v1675 = vsel %vm267, %v1669, 0
    %1677 = vmatprep.subr.bf16.mxu0 0
    %1678 = vmatpush1.bf16.xpose.msra.mxu0 %v1675
    %1679 = vmatprep.subr.bf16.mxu0 0
    %1680 = vmatpush1.bf16.xpose.msra.mxu0 0
    %1681 = vmatprep.subr.bf16.mxu0 0
    %1682 = vmatpush1.bf16.xpose.msra.mxu0 0
    %1683 = vmatprep.subr.bf16.mxu0 0
    %1684 = vmatpush1.bf16.xpose.msra.mxu0 0
    %1685 = vmatprep.subr.bf16.mxu0 0
    %1686 = vmatpush1.bf16.xpose.msra.mxu0 0
    %1687 = vmatprep.subr.bf16.mxu0 0
    %1688 = vmatpush1.bf16.xpose.msra.mxu0 0
    %1689 = vmatprep.subr.bf16.mxu0 0
    %1690 = vmatpush1.bf16.xpose.msra.mxu0 0
    %1691 = vmatprep.subr.bf16.mxu0 0
    %1692 = vmatpush1.bf16.xpose.msra.mxu0 0
    %1693 = vmatprep.subr.bf16.mxu0 0
    %1694 = vmatpush1.bf16.xpose.msra.mxu0 0
    %1695 = vmatprep.subr.bf16.mxu0 0
    %1696 = vmatpush1.bf16.xpose.msra.mxu0 0
    %1697 = vmatprep.subr.bf16.mxu0 0
    %1698 = vmatpush1.bf16.xpose.msra.mxu0 0
    %1699 = vmatprep.subr.bf16.mxu0 0
    %1700 = vmatpush1.bf16.xpose.msra.mxu0 0
    %1701 = vmatprep.subr.bf16.mxu0 0
    %1702 = vmatpush1.bf16.xpose.msra.mxu0 0
    %1703 = vmatprep.subr.bf16.mxu0 0
    %1704 = vmatpush1.bf16.xpose.msra.mxu0 0
    %1705 = vmatprep.subr.bf16.mxu0 0
    %1706 = vmatpush1.bf16.xpose.msra.mxu0 0
    %1707 = vmatprep.subr.bf16.mxu0 0
    %1708 = vmatpush1.bf16.xpose.msra.mxu0 0
    %1709 = vmatprep.mubr.bf16.mxu0 0
    %1710 = vmatmul.mubr.bf16.gmra.mrb[0].mxu0 %v1672
    %v1711 = vpop.f32.mrb[0].mxu0
    %v1712 = vadd.f32 0.0, %v1711
    %v1713 = vpop.f32.mrb[0].mxu0
    %v1714 = vpop.f32.mrb[0].mxu0
    %v1715 = vpop.f32.mrb[0].mxu0
    %1716 = vdwg.mxu0
    %v1718 = vsel %vm267, %v1668, 0
    %v1721 = vsel %vm267, %v1670, 0
    %1723 = vmatprep.subr.bf16.mxu0 0
    %1724 = vmatpush1.bf16.xpose.msra.mxu0 %v1721
    %1725 = vmatprep.subr.bf16.mxu0 0
    %1726 = vmatpush1.bf16.xpose.msra.mxu0 0
    %1727 = vmatprep.subr.bf16.mxu0 0
    %1728 = vmatpush1.bf16.xpose.msra.mxu0 0
    %1729 = vmatprep.subr.bf16.mxu0 0
    %1730 = vmatpush1.bf16.xpose.msra.mxu0 0
    %1731 = vmatprep.subr.bf16.mxu0 0
    %1732 = vmatpush1.bf16.xpose.msra.mxu0 0
    %1733 = vmatprep.subr.bf16.mxu0 0
    %1734 = vmatpush1.bf16.xpose.msra.mxu0 0
    %1735 = vmatprep.subr.bf16.mxu0 0
    %1736 = vmatpush1.bf16.xpose.msra.mxu0 0
    %1737 = vmatprep.subr.bf16.mxu0 0
    %1738 = vmatpush1.bf16.xpose.msra.mxu0 0
    %1739 = vmatprep.subr.bf16.mxu0 0
    %1740 = vmatpush1.bf16.xpose.msra.mxu0 0
    %1741 = vmatprep.subr.bf16.mxu0 0
    %1742 = vmatpush1.bf16.xpose.msra.mxu0 0
    %1743 = vmatprep.subr.bf16.mxu0 0
    %1744 = vmatpush1.bf16.xpose.msra.mxu0 0
    %1745 = vmatprep.subr.bf16.mxu0 0
    %1746 = vmatpush1.bf16.xpose.msra.mxu0 0
    %1747 = vmatprep.subr.bf16.mxu0 0
    %1748 = vmatpush1.bf16.xpose.msra.mxu0 0
    %1749 = vmatprep.subr.bf16.mxu0 0
    %1750 = vmatpush1.bf16.xpose.msra.mxu0 0
    %1751 = vmatprep.subr.bf16.mxu0 0
    %1752 = vmatpush1.bf16.xpose.msra.mxu0 0
    %1753 = vmatprep.subr.bf16.mxu0 0
    %1754 = vmatpush1.bf16.xpose.msra.mxu0 0
    %1755 = vmatprep.mubr.bf16.mxu0 0
    %1756 = vmatmul.mubr.bf16.gmra.mrb[0].mxu0 %v1718
    %v1757 = vpop.f32.mrb[0].mxu0
    %v1758 = vadd.f32 0.0, %v1757
    %v1759 = vpop.f32.mrb[0].mxu0
    %v1760 = vpop.f32.mrb[0].mxu0
    %v1761 = vpop.f32.mrb[0].mxu0
    %1762 = vdwg.mxu0
    %v1763 = vsel %vm267, %v1712, -inf
    %1764 = vmax.xlane.f32.xlu0 %v1763
    %v1765 = vpop.xlane.xlu0 %1764
    %v1766 = vsel %vm267, %v1758, -inf
    %1767 = vmax.xlane.f32.xlu0 %v1766
    %v1768 = vpop.xlane.xlu0 %1767
    %v1769 = vsub.f32 %v1712, %v1765
    %v1770 = vsub.f32 %v1758, %v1768
    %v1771 = vmul.f32 %v1769, 1.442695
    %v1772 = vpow.pop %v1771
    %v1773 = vmul.f32 %v1770, 1.442695
    %v1774 = vpow.pop %v1773
    %v1775 = vsel %vm267, %v1772, 0.0
    %1776 = vadd.xlane.f32.xlu0 %v1775
    %v1777 = vpop.xlane.xlu0 %1776
    %v1778 = vsel %vm267, %v1774, 0.0
    %1779 = vadd.xlane.f32.xlu0 %v1778
    %v1780 = vpop.xlane.xlu0 %1779
    %v1781 = vrcp.pop %v1777
    %v1782 = vmul.f32 %v1772, %v1781
    %v1783 = vrcp.pop %v1780
    %v1784 = vmul.f32 %v1774, %v1783
    %v1785 = vpack.c.bf16 %v1782, %v1782
    %v1786 = vpack.c.bf16 %v1784, %v1784
    %v1787 = vpack.c.bf16 %v1659, %v1659
    %v1788 = vpack.c.bf16 %v1662, %v1662
    %v1790 = vsel %vm267, %v1785, 0
    %v1793 = vsel %vm389, %v1787, 0
    %1795 = vmatprep.subr.bf16.mxu0 0
    %1796 = vmatpush1.bf16.msra.mxu0 %v1793
    %1797 = vmatprep.subr.bf16.mxu0 0
    %1798 = vmatpush1.bf16.msra.mxu0 0
    %1799 = vmatprep.subr.bf16.mxu0 0
    %1800 = vmatpush1.bf16.msra.mxu0 0
    %1801 = vmatprep.subr.bf16.mxu0 0
    %1802 = vmatpush1.bf16.msra.mxu0 0
    %1803 = vmatprep.subr.bf16.mxu0 0
    %1804 = vmatpush1.bf16.msra.mxu0 0
    %1805 = vmatprep.subr.bf16.mxu0 0
    %1806 = vmatpush1.bf16.msra.mxu0 0
    %1807 = vmatprep.subr.bf16.mxu0 0
    %1808 = vmatpush1.bf16.msra.mxu0 0
    %1809 = vmatprep.subr.bf16.mxu0 0
    %1810 = vmatpush1.bf16.msra.mxu0 0
    %1811 = vmatprep.subr.bf16.mxu0 0
    %1812 = vmatpush1.bf16.msra.mxu0 0
    %1813 = vmatprep.subr.bf16.mxu0 0
    %1814 = vmatpush1.bf16.msra.mxu0 0
    %1815 = vmatprep.subr.bf16.mxu0 0
    %1816 = vmatpush1.bf16.msra.mxu0 0
    %1817 = vmatprep.subr.bf16.mxu0 0
    %1818 = vmatpush1.bf16.msra.mxu0 0
    %1819 = vmatprep.subr.bf16.mxu0 0
    %1820 = vmatpush1.bf16.msra.mxu0 0
    %1821 = vmatprep.subr.bf16.mxu0 0
    %1822 = vmatpush1.bf16.msra.mxu0 0
    %1823 = vmatprep.subr.bf16.mxu0 0
    %1824 = vmatpush1.bf16.msra.mxu0 0
    %1825 = vmatprep.subr.bf16.mxu0 0
    %1826 = vmatpush1.bf16.msra.mxu0 0
    %1827 = vmatprep.mubr.bf16.mxu0 0
    %1828 = vmatmul.mubr.bf16.gmra.mrb[0].mxu0 %v1790
    %v1829 = vpop.f32.mrb[0].mxu0
    %v1830 = vadd.f32 0.0, %v1829
    %v1831 = vpop.f32.mrb[0].mxu0
    %v1832 = vpop.f32.mrb[0].mxu0
    %v1833 = vpop.f32.mrb[0].mxu0
    %1834 = vdwg.mxu0
    %v1836 = vsel %vm267, %v1786, 0
    %v1839 = vsel %vm389, %v1788, 0
    %1841 = vmatprep.subr.bf16.mxu0 0
    %1842 = vmatpush1.bf16.msra.mxu0 %v1839
    %1843 = vmatprep.subr.bf16.mxu0 0
    %1844 = vmatpush1.bf16.msra.mxu0 0
    %1845 = vmatprep.subr.bf16.mxu0 0
    %1846 = vmatpush1.bf16.msra.mxu0 0
    %1847 = vmatprep.subr.bf16.mxu0 0
    %1848 = vmatpush1.bf16.msra.mxu0 0
    %1849 = vmatprep.subr.bf16.mxu0 0
    %1850 = vmatpush1.bf16.msra.mxu0 0
    %1851 = vmatprep.subr.bf16.mxu0 0
    %1852 = vmatpush1.bf16.msra.mxu0 0
    %1853 = vmatprep.subr.bf16.mxu0 0
    %1854 = vmatpush1.bf16.msra.mxu0 0
    %1855 = vmatprep.subr.bf16.mxu0 0
    %1856 = vmatpush1.bf16.msra.mxu0 0
    %1857 = vmatprep.subr.bf16.mxu0 0
    %1858 = vmatpush1.bf16.msra.mxu0 0
    %1859 = vmatprep.subr.bf16.mxu0 0
    %1860 = vmatpush1.bf16.msra.mxu0 0
    %1861 = vmatprep.subr.bf16.mxu0 0
    %1862 = vmatpush1.bf16.msra.mxu0 0
    %1863 = vmatprep.subr.bf16.mxu0 0
    %1864 = vmatpush1.bf16.msra.mxu0 0
    %1865 = vmatprep.subr.bf16.mxu0 0
    %1866 = vmatpush1.bf16.msra.mxu0 0
    %1867 = vmatprep.subr.bf16.mxu0 0
    %1868 = vmatpush1.bf16.msra.mxu0 0
    %1869 = vmatprep.subr.bf16.mxu0 0
    %1870 = vmatpush1.bf16.msra.mxu0 0
    %1871 = vmatprep.subr.bf16.mxu0 0
    %1872 = vmatpush1.bf16.msra.mxu0 0
    %1873 = vmatprep.mubr.bf16.mxu0 0
    %1874 = vmatmul.mubr.bf16.gmra.mrb[0].mxu0 %v1836
    %v1875 = vpop.f32.mrb[0].mxu0
    %v1876 = vadd.f32 0.0, %v1875
    %v1877 = vpop.f32.mrb[0].mxu0
    %v1878 = vpop.f32.mrb[0].mxu0
    %v1879 = vpop.f32.mrb[0].mxu0
    %1880 = vdwg.mxu0
    %v1881 = vpack.c.bf16 %v1876, %v1830
    %s1882 = scalar_lea.vmem %s3, 12
    %v1883 = vld [vmem:[%s1882] sm:$0xf]
    %v1885 = vsel %vm267, %v1881, 0
    %v1888 = vsel %vm389, %v1883, 0
    %1890 = vmatprep.subr.bf16.mxu0 0
    %1891 = vmatpush1.bf16.msra.mxu0 %v1888
    %1892 = vmatprep.subr.bf16.mxu0 0
    %1893 = vmatpush1.bf16.msra.mxu0 0
    %1894 = vmatprep.subr.bf16.mxu0 0
    %1895 = vmatpush1.bf16.msra.mxu0 0
    %1896 = vmatprep.subr.bf16.mxu0 0
    %1897 = vmatpush1.bf16.msra.mxu0 0
    %1898 = vmatprep.subr.bf16.mxu0 0
    %1899 = vmatpush1.bf16.msra.mxu0 0
    %1900 = vmatprep.subr.bf16.mxu0 0
    %1901 = vmatpush1.bf16.msra.mxu0 0
    %1902 = vmatprep.subr.bf16.mxu0 0
    %1903 = vmatpush1.bf16.msra.mxu0 0
    %1904 = vmatprep.subr.bf16.mxu0 0
    %1905 = vmatpush1.bf16.msra.mxu0 0
    %1906 = vmatprep.subr.bf16.mxu0 0
    %1907 = vmatpush1.bf16.msra.mxu0 0
    %1908 = vmatprep.subr.bf16.mxu0 0
    %1909 = vmatpush1.bf16.msra.mxu0 0
    %1910 = vmatprep.subr.bf16.mxu0 0
    %1911 = vmatpush1.bf16.msra.mxu0 0
    %1912 = vmatprep.subr.bf16.mxu0 0
    %1913 = vmatpush1.bf16.msra.mxu0 0
    %1914 = vmatprep.subr.bf16.mxu0 0
    %1915 = vmatpush1.bf16.msra.mxu0 0
    %1916 = vmatprep.subr.bf16.mxu0 0
    %1917 = vmatpush1.bf16.msra.mxu0 0
    %1918 = vmatprep.subr.bf16.mxu0 0
    %1919 = vmatpush1.bf16.msra.mxu0 0
    %1920 = vmatprep.subr.bf16.mxu0 0
    %1921 = vmatpush1.bf16.msra.mxu0 0
    %1922 = vmatprep.mubr.bf16.mxu0 0
    %1923 = vmatmul.mubr.bf16.gmra.mrb[0].mxu0 %v1885
    %v1924 = vpop.f32.mrb[0].mxu0
    %v1925 = vadd.f32 0.0, %v1924
    %v1926 = vpop.f32.mrb[0].mxu0
    %v1927 = vpop.f32.mrb[0].mxu0
    %v1928 = vadd.f32 0.0, %v1927
    %v1929 = vpop.f32.mrb[0].mxu0
    %1930 = vdwg.mxu0
    %v1931 = vadd.f32 %v1462, %v1925
    %v1932 = vadd.f32 %v1463, %v1928
    %v1933 = vld [vmem:[%s1 + $0x5] sm:$0x1]
    %v1934 = vlaneseq
    %v1935 = vshrl.u32 %v1934, 7
    %v1936 = vsub.s32 0, %v1935
    %v1937 = vrot.slane %v1933, %v1936
    %v1938 = vadd.f32 %v1931, %v1937
    %v1939 = vadd.f32 %v1932, %v1937
    %v1940 = vadd.f32 %v25, %v1938
    %v1941 = vadd.f32 %v26, %v1939
    %v1942 = vld [vmem:[%s1 + $0x6] sm:$0x1]
    %v1943 = vld [vmem:[%s1 + $0x7] sm:$0x1]
    %v1944 = vsel %vm29, %v1940, 0.0
    %1945 = vadd.xlane.f32.xlu0 %v1944
    %v1946 = vpop.xlane.xlu0 %1945
    %v1947 = vsel %vm29, %v1941, 0.0
    %1948 = vadd.xlane.f32.xlu0 %v1947
    %v1949 = vpop.xlane.xlu0 %1948
    %v1950 = vmul.f32 %v1946, %v36
    %v1951 = vmul.f32 %v1949, %v36
    %v1952 = vsub.f32 %v1940, %v1950
    %v1953 = vsub.f32 %v1941, %v1951
    %v1954 = vmul.f32 %v1952, %v1952
    %v1955 = vmul.f32 %v1953, %v1953
    %v1956 = vsel %vm29, %v1954, 0.0
    %1957 = vadd.xlane.f32.xlu0 %v1956
    %v1958 = vpop.xlane.xlu0 %1957
    %v1959 = vsel %vm29, %v1955, 0.0
    %1960 = vadd.xlane.f32.xlu0 %v1959
    %v1961 = vpop.xlane.xlu0 %1960
    %v1962 = vmul.f32 %v1958, %v36
    %v1963 = vmul.f32 %v1961, %v36
    %v1964 = vadd.f32 %v1962, 1e-05
    %v1965 = vadd.f32 %v1963, 1e-05
    %v1966 = vrsqrt.pop %v1964
    %v1967 = vrsqrt.pop %v1965
    %v1968 = vmul.f32 %v1952, %v1966
    %v1969 = vmul.f32 %v1953, %v1967
    %v1970 = vlaneseq
    %v1971 = vshrl.u32 %v1970, 7
    %v1972 = vsub.s32 0, %v1971
    %v1973 = vrot.slane %v1942, %v1972
    %v1974 = vmul.f32 %v1968, %v1973
    %v1975 = vmul.f32 %v1969, %v1973
    %v1976 = vlaneseq
    %v1977 = vshrl.u32 %v1976, 7
    %v1978 = vsub.s32 0, %v1977
    %v1979 = vrot.slane %v1943, %v1978
    %v1980 = vadd.f32 %v1974, %v1979
    %v1981 = vadd.f32 %v1975, %v1979
    %v1982 = vpack.c.bf16 %v1981, %v1980
    %v1983 = vld [vmem:[%s4] sm:$0xf]
    %v1984 = vld [vmem:[%s4 + $0x4] sm:$0xf]
    %v1985 = vld [vmem:[%s4 + $0x8] sm:$0xf]
    %v1986 = vld [vmem:[%s4 + $0xc] sm:$0xf]
    %v1987 = vld [vmem:[%s1 + $0x8] sm:$0x1]
    %v1988 = vlaneseq
    %v1989 = vshrl.u32 %v1988, 7
    %v1990 = vsub.s32 0, %v1989
    %v1991 = vrot.slane %v1987, %v1990
    %v1996 = vunpack.c.l.b16 %v1983
    %v1997 = vunpack.c.l.b16 %v1984
    %v1998 = vunpack.c.l.b16 %v1985
    %v1999 = vunpack.c.l.b16 %v1986
    %v2000 = vpack.c.b16 %v1997, %v1996
    %v2001 = vpack.c.b16 %v1999, %v1998
    %v2005 = vsel %vm29, %v1982, 0
    %2007 = vmatprep.subr.bf16.mxu0 0
    %2008 = vmatpush1.bf16.msra.mxu0 %v2000
    %2009 = vmatprep.subr.bf16.mxu0 0
    %2010 = vmatpush1.bf16.msra.mxu0 %v2001
    %2011 = vmatprep.subr.bf16.mxu0 0
    %2012 = vmatpush1.bf16.msra.mxu0 0
    %2013 = vmatprep.subr.bf16.mxu0 0
    %2014 = vmatpush1.bf16.msra.mxu0 0
    %2015 = vmatprep.subr.bf16.mxu0 0
    %2016 = vmatpush1.bf16.msra.mxu0 0
    %2017 = vmatprep.subr.bf16.mxu0 0
    %2018 = vmatpush1.bf16.msra.mxu0 0
    %2019 = vmatprep.subr.bf16.mxu0 0
    %2020 = vmatpush1.bf16.msra.mxu0 0
    %2021 = vmatprep.subr.bf16.mxu0 0
    %2022 = vmatpush1.bf16.msra.mxu0 0
    %2023 = vmatprep.subr.bf16.mxu0 0
    %2024 = vmatpush1.bf16.msra.mxu0 0
    %2025 = vmatprep.subr.bf16.mxu0 0
    %2026 = vmatpush1.bf16.msra.mxu0 0
    %2027 = vmatprep.subr.bf16.mxu0 0
    %2028 = vmatpush1.bf16.msra.mxu0 0
    %2029 = vmatprep.subr.bf16.mxu0 0
    %2030 = vmatpush1.bf16.msra.mxu0 0
    %2031 = vmatprep.subr.bf16.mxu0 0
    %2032 = vmatpush1.bf16.msra.mxu0 0
    %2033 = vmatprep.subr.bf16.mxu0 0
    %2034 = vmatpush1.bf16.msra.mxu0 0
    %2035 = vmatprep.subr.bf16.mxu0 0
    %2036 = vmatpush1.bf16.msra.mxu0 0
    %2037 = vmatprep.subr.bf16.mxu0 0
    %2038 = vmatpush1.bf16.msra.mxu0 0
    %2039 = vmatprep.mubr.bf16.mxu0 0
    %2040 = vmatmul.mubr.bf16.gmra.mrb[0].mxu0 %v2005
    %v2041 = vpop.f32.mrb[0].mxu0
    %v2042 = vadd.f32 %v1991, %v2041
    %v2043 = vpop.f32.mrb[0].mxu0
    %v2044 = vpop.f32.mrb[0].mxu0
    %v2045 = vadd.f32 %v1991, %v2044
    %v2046 = vpop.f32.mrb[0].mxu0
    %2047 = vdwg.mxu0
    %v2048 = vmul.f32 %v2042, 0.5
    %v2049 = vmul.f32 %v2045, 0.5
    %v2050 = vmul.f32 %v2042, 0.70710677
    %v2051 = vmul.f32 %v2045, 0.70710677
    %v2052 = vand.u32 2147483647, %v2050
    %v2053 = vand.u32 2147483647, %v2051
    %v2054 = vmul.f32 %v2052, 0.3275911
    %v2055 = vmul.f32 %v2053, 0.3275911
    %v2056 = vadd.f32 %v2054, 1.0
    %v2057 = vadd.f32 %v2055, 1.0
    %v2058 = vrcp.pop %v2056
    %v2059 = vmul.f32 1.0, %v2058
    %v2060 = vrcp.pop %v2057
    %v2061 = vmul.f32 1.0, %v2060
    %v2062 = vmul.f32 %v2059, 1.0614054
    %v2063 = vmul.f32 %v2061, 1.0614054
    %v2064 = vadd.f32 %v2062, -1.4531521
    %v2065 = vadd.f32 %v2063, -1.4531521
    %v2066 = vmul.f32 %v2064, %v2059
    %v2067 = vmul.f32 %v2065, %v2061
    %v2068 = vadd.f32 %v2066, 1.4214138
    %v2069 = vadd.f32 %v2067, 1.4214138
    %v2070 = vmul.f32 %v2068, %v2059
    %v2071 = vmul.f32 %v2069, %v2061
    %v2072 = vadd.f32 %v2070, -0.28449672
    %v2073 = vadd.f32 %v2071, -0.28449672
    %v2074 = vmul.f32 %v2072, %v2059
    %v2075 = vmul.f32 %v2073, %v2061
    %v2076 = vadd.f32 %v2074, 0.2548296
    %v2077 = vadd.f32 %v2075, 0.2548296
    %v2078 = vmul.f32 %v2076, %v2059
    %v2079 = vmul.f32 %v2077, %v2061
    %v2080 = vmul.f32 %v2050, %v2050
    %v2081 = vmul.f32 %v2051, %v2051
    %v2082 = vsub.f32 0.0, %v2080
    %v2083 = vsub.f32 0.0, %v2081
    %v2084 = vmul.f32 %v2082, 1.442695
    %v2085 = vpow.pop %v2084
    %v2086 = vmul.f32 %v2083, 1.442695
    %v2087 = vpow.pop %v2086
    %v2088 = vmul.f32 %v2078, %v2085
    %v2089 = vmul.f32 %v2079, %v2087
    %v2090 = vsub.f32 1.0, %v2088
    %v2091 = vsub.f32 1.0, %v2089
    %vm2092 = vcmp.lt.f32.partialorder %v2050, 0.0
    %vm2093 = vcmp.lt.f32.partialorder %v2051, 0.0
    %v2094 = vsub.f32 0.0, %v2090
    %v2095 = vsub.f32 0.0, %v2091
    %v2096 = vsel %vm2092, %v2094, %v2090
    %v2097 = vsel %vm2093, %v2095, %v2091
    %v2098 = vadd.f32 %v2096, 1.0
    %v2099 = vadd.f32 %v2097, 1.0
    %v2100 = vmul.f32 %v2048, %v2098
    %v2101 = vmul.f32 %v2049, %v2099
    %v2102 = vpack.c.bf16 %v2101, %v2100
    %v2103 = vld [vmem:[%s5] sm:$0xf]
    %v2104 = vld [vmem:[%s5 + $0x4] sm:$0xf]
    %v2105 = vld [vmem:[%s5 + $0x8] sm:$0xf]
    %v2106 = vld [vmem:[%s5 + $0xc] sm:$0xf]
    %v2107 = vld [vmem:[%s5 + $0x10] sm:$0xf]
    %v2108 = vld [vmem:[%s5 + $0x14] sm:$0xf]
    %v2109 = vld [vmem:[%s5 + $0x18] sm:$0xf]
    %v2110 = vld [vmem:[%s5 + $0x1c] sm:$0xf]
    %v2111 = vld [vmem:[%s5 + $0x20] sm:$0xf]
    %v2112 = vld [vmem:[%s5 + $0x24] sm:$0xf]
    %v2113 = vld [vmem:[%s5 + $0x28] sm:$0xf]
    %v2114 = vld [vmem:[%s5 + $0x2c] sm:$0xf]
    %v2115 = vld [vmem:[%s5 + $0x30] sm:$0xf]
    %v2116 = vld [vmem:[%s5 + $0x34] sm:$0xf]
    %v2117 = vld [vmem:[%s5 + $0x38] sm:$0xf]
    %v2118 = vld [vmem:[%s5 + $0x3c] sm:$0xf]
    %v2119 = vld [vmem:[%s1 + $0x9] sm:$0x1]
    %v2120 = vlaneseq
    %v2121 = vshrl.u32 %v2120, 7
    %v2122 = vsub.s32 0, %v2121
    %v2123 = vrot.slane %v2119, %v2122
    %v2140 = vunpack.c.l.b16 %v2103
    %v2141 = vunpack.c.l.b16 %v2104
    %v2142 = vunpack.c.l.b16 %v2105
    %v2143 = vunpack.c.l.b16 %v2106
    %v2144 = vunpack.c.l.b16 %v2107
    %v2145 = vunpack.c.l.b16 %v2108
    %v2146 = vunpack.c.l.b16 %v2109
    %v2147 = vunpack.c.l.b16 %v2110
    %v2148 = vunpack.c.l.b16 %v2111
    %v2149 = vunpack.c.l.b16 %v2112
    %v2150 = vunpack.c.l.b16 %v2113
    %v2151 = vunpack.c.l.b16 %v2114
    %v2152 = vunpack.c.l.b16 %v2115
    %v2153 = vunpack.c.l.b16 %v2116
    %v2154 = vunpack.c.l.b16 %v2117
    %v2155 = vunpack.c.l.b16 %v2118
    %v2156 = vpack.c.b16 %v2141, %v2140
    %v2157 = vpack.c.b16 %v2143, %v2142
    %v2158 = vpack.c.b16 %v2145, %v2144
    %v2159 = vpack.c.b16 %v2147, %v2146
    %v2160 = vpack.c.b16 %v2149, %v2148
    %v2161 = vpack.c.b16 %v2151, %v2150
    %v2162 = vpack.c.b16 %v2153, %v2152
    %v2163 = vpack.c.b16 %v2155, %v2154
    %2172 = vmatprep.subr.bf16.mxu0 0
    %2173 = vmatpush1.bf16.msra.mxu0 %v2156
    %2174 = vmatprep.subr.bf16.mxu0 0
    %2175 = vmatpush1.bf16.msra.mxu0 %v2157
    %2176 = vmatprep.subr.bf16.mxu0 0
    %2177 = vmatpush1.bf16.msra.mxu0 %v2158
    %2178 = vmatprep.subr.bf16.mxu0 0
    %2179 = vmatpush1.bf16.msra.mxu0 %v2159
    %2180 = vmatprep.subr.bf16.mxu0 0
    %2181 = vmatpush1.bf16.msra.mxu0 %v2160
    %2182 = vmatprep.subr.bf16.mxu0 0
    %2183 = vmatpush1.bf16.msra.mxu0 %v2161
    %2184 = vmatprep.subr.bf16.mxu0 0
    %2185 = vmatpush1.bf16.msra.mxu0 %v2162
    %2186 = vmatprep.subr.bf16.mxu0 0
    %2187 = vmatpush1.bf16.msra.mxu0 %v2163
    %2188 = vmatprep.subr.bf16.mxu0 0
    %2189 = vmatpush1.bf16.msra.mxu0 0
    %2190 = vmatprep.subr.bf16.mxu0 0
    %2191 = vmatpush1.bf16.msra.mxu0 0
    %2192 = vmatprep.subr.bf16.mxu0 0
    %2193 = vmatpush1.bf16.msra.mxu0 0
    %2194 = vmatprep.subr.bf16.mxu0 0
    %2195 = vmatpush1.bf16.msra.mxu0 0
    %2196 = vmatprep.subr.bf16.mxu0 0
    %2197 = vmatpush1.bf16.msra.mxu0 0
    %2198 = vmatprep.subr.bf16.mxu0 0
    %2199 = vmatpush1.bf16.msra.mxu0 0
    %2200 = vmatprep.subr.bf16.mxu0 0
    %2201 = vmatpush1.bf16.msra.mxu0 0
    %2202 = vmatprep.subr.bf16.mxu0 0
    %2203 = vmatpush1.bf16.msra.mxu0 0
    %2204 = vmatprep.mubr.bf16.mxu0 0
    %2205 = vmatmul.mubr.bf16.gmra.mrb[0].mxu0 %v2102
    %v2206 = vpop.f32.mrb[0].mxu0
    %v2207 = vadd.f32 %v2123, %v2206
    %v2208 = vpop.f32.mrb[0].mxu0
    %v2209 = vpop.f32.mrb[0].mxu0
    %v2210 = vadd.f32 %v2123, %v2209
    %v2211 = vpop.f32.mrb[0].mxu0
    %2212 = vdwg.mxu0
    %v2213 = vadd.f32 %v1940, %v2207
    %v2214 = vadd.f32 %v1941, %v2210
    %2215 = vst.msk [vmem:[#allocation2] sm:$0xff] %vm29, %v2213
    %2216 = vst.msk [vmem:[#allocation2 + $0x8] sm:$0xff] %vm29, %v2214
    // Predicated region
    $region26: #{tpu_custom_call.1} parent=1 // pred_check
      _
    $region27: #{tpu_custom_call.1} parent=1 // pred_check_branch
      %2218 = sbr.rel (0) target = $region29
    $region28: #{tpu_custom_call.1} parent=1 // pred_region
      %s2220 = ssub.s32 256, 256
      %2221 = vsyncadd [#allocation3], %s2220
      %s2222 = sshll.u32 [#allocation2], 4
      %s2223 = int_to_ptr.vmem [resolvable:$true] %s2222
      %2228 = dma.vmem_to_hbm [thread:$0]  %s2223, 256, %s6, [#allocation3], 128, 128, 8
    $region29: #{tpu_custom_call.1} parent=1 // pred_fallthru
      _
    // Predicated region
    $region30: #{tpu_custom_call.1} parent=1 // pred_check
      _
    $region31: #{tpu_custom_call.1} parent=1 // pred_check_branch
      %2230 = sbr.rel (0) target = $region33
    $region32: #{tpu_custom_call.1} parent=1 // pred_region
      %2231 = dma.done [#allocation3], 256
    $region33: #{tpu_custom_call.1} parent=1 // pred_fallthru
      _
    %2232 = vsyncpa [#allocation3], 1

</llo_original>
